<compile_context>
chip_gen: v7x
topology: tpu7x:2x2x1
jax: 0.10.0
libtpu: 0.0.40
codegen_flags: <defaults>
</compile_context>

<pallas_src>
import functools

import jax
import jax.numpy as jnp
import numpy as np
from jax import lax
from jax.experimental import pallas as pl
from jax.experimental.pallas import tpu as pltpu

K = 7      # conv kernel size
PAD = 3    # same padding for the 7x7 conv


def _round_up(a, b):
    return (a + b - 1) // b * b


def _build_conv_rhs(weight, width, c_total):
    """Stacked banded width-conv matrices: one deep MXU RHS of shape (2*K*W, W).

    rhs[(c*K + kh)*W + i, o] = weight[0, c, kh, i - o + PAD] inside the 7-tap
    band, else 0, with the 1/C of the channel mean folded into the avg (c == 0)
    taps.  Width zero-padding is implicit (the contraction index i only covers
    the valid [0, W) columns)."""
    w = weight.reshape(2, K, K).astype(jnp.float32)
    w = w.at[0].multiply(1.0 / c_total)            # mean = sum * (1/C), folded here
    i = jnp.arange(width)[:, None]                 # contraction (input) column
    o = jnp.arange(width)[None, :]                 # output column
    kw = i - o + PAD
    valid = (kw >= 0) & (kw < K)
    bands = jnp.where(valid[None, None], w[:, :, jnp.clip(kw, 0, K - 1)], 0.0)
    return bands.reshape(2 * K * width, width).astype(jnp.bfloat16)


def _spatial_attention_kernel(rhs_ref, b_ref, x_ref, o_ref,
                              sum_ref, max_ref, pad_ref, lhs_ref,
                              *, c_total, c_block, height, width, need_mask):
    # rhs_ref : VMEM (2*K*W, W) bf16   stacked banded conv matrices (resident)
    # b_ref   : SMEM (1,)       f32    conv bias
    # x_ref   : VMEM (1, Cb, H*W)      lane-dense channel chunk of one batch elem
    # o_ref   : VMEM (1, H, W)         attention map (resident across C steps)
    # sum_ref : VMEM (1, H*W) f32      running channel sum
    # max_ref : VMEM (1, H*W) f32      running channel max
    # pad_ref : VMEM (2, Hp, W) f32    height-padded [sum; max] pooled maps
    # lhs_ref : VMEM (H, 2*K*W) f32    fused conv LHS
    ci = pl.program_id(1)
    hw = height * width

    @pl.when(ci == 0)
    def _init():
        sum_ref[...] = jnp.zeros_like(sum_ref)
        max_ref[...] = jnp.full_like(max_ref, -jnp.inf)

    xb = x_ref[0].astype(jnp.float32)                       # (Cb, HW), lane-dense

    if need_mask:                                           # ragged channel tail
        ch = ci * c_block + lax.broadcasted_iota(jnp.int32, (c_block, hw), 0)
        valid = ch < c_total
        xs = jnp.where(valid, xb, 0.0)
        xm = jnp.where(valid, xb, -jnp.inf)
    else:
        xs = xb
        xm = xb

    # Channel reduction: the bulk is plain vreg adds/maxes on the VPU; only the
    # final 8-sublane collapse per step touches the XLU (negligible per step).
    sum_ref[...] += jnp.sum(xs, axis=0, keepdims=True)
    max_ref[...] = jnp.maximum(max_ref[...], jnp.max(xm, axis=0, keepdims=True))

    @pl.when(ci == pl.num_programs(1) - 1)
    def _finalize():
        bias = b_ref[0]

        # Re-zero only the height-padding rows (scratch persists across steps).
        hp = pad_ref.shape[1]
        for c in range(2):
            pad_ref[c, 0:PAD, :] = jnp.zeros((PAD, width), jnp.float32)
            pad_ref[c, PAD + height:, :] = jnp.zeros(
                (hp - PAD - height, width), jnp.float32)

        # Unflatten the lane-dense pooled vectors into (H, W) rows, once per
        # batch element (ref loads/stores only, no vector reshapes).
        for h in range(height):
            cols = slice(h * width, (h + 1) * width)
            pad_ref[0, PAD + h:PAD + h + 1, :] = sum_ref[0:1, cols]
            pad_ref[1, PAD + h:PAD + h + 1, :] = max_ref[0:1, cols]

        # Fused conv LHS: 14 height-shifted slices side by side -> (H, 2*K*W).
        for c in range(2):
            for kh in range(K):
                col = (c * K + kh) * width
                lhs_ref[:, col:col + width] = pad_ref[c, kh:kh + height, :]

        # One deep bf16 MXU matmul (contraction depth 2*K*W) instead of 14
        # shallow ones; f32 accumulate.  The 1/C mean scale lives in the RHS.
        acc = jnp.dot(lhs_ref[...].astype(jnp.bfloat16), rhs_ref[...],
                      preferred_element_type=jnp.float32)            # (H, W)
        o_ref[...] = jax.nn.sigmoid(acc + bias)[None].astype(o_ref.dtype)


def _vmem_capacity_bytes():
    try:
        return int(pltpu.get_tpu_info().vmem_capacity_bytes)
    except Exception:
        return 64 << 20               # conservative (v7x per-TensorCore VMEM)


def _pick_c_block(c_total, hw, itemsize, budget_bytes):
    """Largest channel block whose (8,128)-padded (Cb, HW) tile fits the budget.
    Cb is a multiple of 8 (sublane tile) unless one block covers all channels."""
    per_ch = _round_up(hw, 128) * itemsize
    cap = max(1, budget_bytes // per_ch)
    if cap >= c_total:
        return c_total
    return min(c_total, max(8, (cap // 8) * 8))


def spatial_attention(x, weight, bias, *, max_block_bytes=None):
    """x: (N, C, H, W); weight: (1, 2, 7, 7); bias: (1,). Returns (N, 1, H, W)."""
    N, C, H, W = x.shape
    HW = H * W

    rhs = _build_conv_rhs(weight, W, C)                     # (2*K*W, W) bf16
    b_flat = bias.reshape(-1).astype(jnp.float32)           # (1,)

    # Generation-aware tiling: ~8 MiB per x block (>= ~85% of HBM roofline),
    # capped by per-core VMEM (64 MiB on v7x vs 128 MiB on v5e/v6e).
    vmem_cap = _vmem_capacity_bytes()
    budget = max(512 << 10, min(8 << 20, vmem_cap // 8))
    if max_block_bytes is not None:
        budget = max_block_bytes
    Cb = _pick_c_block(C, HW, x.dtype.itemsize, budget)
    n_c = pl.cdiv(C, Cb)
    need_mask = (C % Cb) != 0

    per_ch = _round_up(HW, 128) * x.dtype.itemsize          # (8,128)-padded bytes
    x_block_bytes = _round_up(Cb, 8) * per_ch
    vmem_limit = int(min(vmem_cap, max(2 * x_block_bytes + (4 << 20), 32 << 20)))

    Hp = _round_up(H + 2 * PAD, 8)                          # aligned padded height

    kernel = functools.partial(
        _spatial_attention_kernel,
        c_total=C, c_block=Cb, height=H, width=W, need_mask=need_mask)

    # Lane-dense layout: flatten the spatial dims so the channel reduction and
    # its DMAs use all 128 lanes even when W < 128.
    x_flat = x.reshape(N, C, HW)

    out = pl.pallas_call(
        kernel,
        out_shape=jax.ShapeDtypeStruct((N, H, W), x.dtype),
        grid=(N, n_c),
        in_specs=[
            # banded conv RHS: small, VMEM-resident for the whole grid
            pl.BlockSpec((2 * K * W, W), lambda n, ci: (0, 0)),
            # conv bias: scalar in SMEM
            pl.BlockSpec(memory_space=pltpu.MemorySpace.SMEM),
            # x: one lane-dense (batch, channel-chunk) tile per grid step
            pl.BlockSpec((1, Cb, HW), lambda n, ci: (n, ci, 0)),
        ],
        # output block constant across the channel (reduction) axis -> resident,
        # written once in the finalize of the last channel step.
        out_specs=pl.BlockSpec((1, H, W), lambda n, ci: (n, 0, 0)),
        scratch_shapes=[
            pltpu.VMEM((1, HW), jnp.float32),          # running channel sum
            pltpu.VMEM((1, HW), jnp.float32),          # running channel max
            pltpu.VMEM((2, Hp, W), jnp.float32),       # height-padded pooled maps
            pltpu.VMEM((H, 2 * K * W), jnp.float32),   # fused conv LHS
        ],
        compiler_params=pltpu.CompilerParams(
            dimension_semantics=("parallel", "arbitrary"),
            vmem_limit_bytes=vmem_limit),
    )(rhs, b_flat, x_flat)

    # NOTE: on v7x with N == 1 only one TensorCore is used; splitting H*W into
    # two row blocks (with a 3-row halo for the 7x7 conv) would occupy both
    # cores.  Left out here to keep the grid/finalize simple.
    return out.reshape(N, 1, H, W)


def spatial_attention_ref(x, weight, bias):
    """Pure-JAX reference matching the PyTorch forward."""
    avg = jnp.mean(x, axis=1, keepdims=True)
    mx = jnp.max(x, axis=1, keepdims=True)
    pooled = jnp.concatenate([avg, mx], axis=1)              # (N, 2, H, W)
    y = lax.conv_general_dilated(
        pooled, weight, window_strides=(1, 1),
        padding=((PAD, PAD), (PAD, PAD)),
        dimension_numbers=("NCHW", "OIHW", "NCHW"),
        precision=lax.Precision.HIGHEST)
    y = y + bias.reshape(1, 1, 1, 1)
    return jax.nn.sigmoid(y)


if __name__ == "__main__":
    key = jax.random.PRNGKey(0)
    kx, kw_, kb, kx2 = jax.random.split(key, 4)

    # Deterministic parameter init (Conv2d(2, 1, 7, padding=3) shapes).
    fan_in = 2 * K * K
    bound = 1.0 / np.sqrt(fan_in)
    weight = jax.random.uniform(kw_, (1, 2, K, K), jnp.float32, -bound, bound)
    bias = jax.random.uniform(kb, (1,), jnp.float32, -bound, bound)

    # Primary check at the module's small example shape.
    N, C, H, W = 2, 4, 16, 16
    x = jax.random.normal(kx, (N, C, H, W), dtype=jnp.float32)
    out = jax.block_until_ready(spatial_attention(x, weight, bias))
    ref = spatial_attention_ref(x, weight, bias)
    # Conv runs as a single-pass bf16 MXU matmul (f32 accumulate), so compare
    # with a tolerance appropriate for bf16 inputs.
    np.testing.assert_allclose(np.asarray(out), np.asarray(ref),
                               rtol=5e-3, atol=5e-3)

    # Secondary check: exercises the multi-step channel grid + ragged-tail
    # masking path with a deliberately tiny channel-block budget.
    N2, C2, H2, W2 = 1, 20, 8, 8
    x2 = jax.random.normal(kx2, (N2, C2, H2, W2), dtype=jnp.float32)
    out2 = jax.block_until_ready(
        spatial_attention(x2, weight, bias, max_block_bytes=4096))
    ref2 = spatial_attention_ref(x2, weight, bias)
    np.testing.assert_allclose(np.asarray(out2), np.asarray(ref2),
                               rtol=5e-3, atol=5e-3)

    print("KERNEL_OK")
</pallas_src>

<mosaic_0001>
module attributes {stable_mosaic.version = 11 : i64} {
  func.func @_spatial_attention_kernel(%arg0: i32, %arg1: i32, %arg2: memref<224x16xbf16, #tpu.memory_space<vmem>>, %arg3: memref<1xf32, #tpu.memory_space<smem>>, %arg4: memref<1x4x256xf32, #tpu.memory_space<vmem>>, %arg5: memref<1x16x16xf32, #tpu.memory_space<vmem>>, %arg6: memref<1x256xf32, #tpu.memory_space<vmem>>, %arg7: memref<1x256xf32, #tpu.memory_space<vmem>>, %arg8: memref<2x24x16xf32, #tpu.memory_space<vmem>>, %arg9: memref<16x224xf32, #tpu.memory_space<vmem>>) attributes {dimension_semantics = [#tpu.dimension_semantics<parallel>, #tpu.dimension_semantics<arbitrary>], iteration_bounds = array<i64: 2, 1>, scalar_prefetch = 0 : i64, scratch_operands = 4 : i64, tpu.core_type = #tpu.core_type<tc>, window_params = [{pipeline_mode = #tpu.pipeline_mode<synchronous>, transform_indices = @transform_0, window_bounds = array<i64: 224, 16>}, {transform_indices = @transform_1, window_bounds = array<i64: 1>}, {transform_indices = @transform_2, window_bounds = array<i64: 1, 4, 256>}, {transform_indices = @transform_3, window_bounds = array<i64: 1, 16, 16>}]} {
    %c0_i32 = arith.constant 0 : i32
    %0 = arith.cmpi eq, %arg1, %c0_i32 : i32
    %1 = arith.extui %0 : i1 to i32
    %c0_i32_0 = arith.constant 0 : i32
    %2 = arith.cmpi ne, %1, %c0_i32_0 : i32
    scf.if %2 {
      %cst_14 = arith.constant 0.000000e+00 : f32
      %18 = vector.broadcast %cst_14 : f32 to vector<1x256xf32>
      %c0_15 = arith.constant 0 : index
      %c0_16 = arith.constant 0 : index
      %19 = vector.load %arg6[%c0_15, %c0_16] : memref<1x256xf32, #tpu.memory_space<vmem>>, vector<1x256xf32>
      tpu.vector_store %arg6[%c0_15, %c0_16], %18 {strides = array<i32>} : memref<1x256xf32, #tpu.memory_space<vmem>>, vector<1x256xf32>,
      %cst_17 = arith.constant 0xFF800000 : f32
      %20 = vector.broadcast %cst_17 : f32 to vector<1x256xf32>
      %c0_18 = arith.constant 0 : index
      %c0_19 = arith.constant 0 : index
      %21 = vector.load %arg7[%c0_18, %c0_19] : memref<1x256xf32, #tpu.memory_space<vmem>>, vector<1x256xf32>
      tpu.vector_store %arg7[%c0_18, %c0_19], %20 {strides = array<i32>} : memref<1x256xf32, #tpu.memory_space<vmem>>, vector<1x256xf32>,
    } else {
    }
    %c0 = arith.constant 0 : index
    %c0_1 = arith.constant 0 : index
    %c0_2 = arith.constant 0 : index
    %3 = vector.load %arg4[%c0, %c0_1, %c0_2] : memref<1x4x256xf32, #tpu.memory_space<vmem>>, vector<1x4x256xf32>
    %4 = vector.shape_cast %3 : vector<1x4x256xf32> to vector<4x256xf32>
    %c0_3 = arith.constant 0 : index
    %c0_4 = arith.constant 0 : index
    %5 = vector.load %arg6[%c0_3, %c0_4] : memref<1x256xf32, #tpu.memory_space<vmem>>, vector<1x256xf32>
    %cst = arith.constant dense<0.000000e+00> : vector<256xf32>
    %6 = vector.multi_reduction <add>, %4, %cst [0] : vector<4x256xf32> to vector<256xf32>
    %7 = vector.shape_cast %6 : vector<256xf32> to vector<1x256xf32>
    %8 = arith.addf %5, %7 : vector<1x256xf32>
    %c0_5 = arith.constant 0 : index
    %c0_6 = arith.constant 0 : index
    %9 = vector.load %arg6[%c0_5, %c0_6] : memref<1x256xf32, #tpu.memory_space<vmem>>, vector<1x256xf32>
    tpu.vector_store %arg6[%c0_5, %c0_6], %8 {strides = array<i32>} : memref<1x256xf32, #tpu.memory_space<vmem>>, vector<1x256xf32>,
    %c0_7 = arith.constant 0 : index
    %c0_8 = arith.constant 0 : index
    %10 = vector.load %arg7[%c0_7, %c0_8] : memref<1x256xf32, #tpu.memory_space<vmem>>, vector<1x256xf32>
    %cst_9 = arith.constant dense<0xFF800000> : vector<256xf32>
    %11 = vector.multi_reduction <maximumf>, %4, %cst_9 [0] : vector<4x256xf32> to vector<256xf32>
    %12 = vector.shape_cast %11 : vector<256xf32> to vector<1x256xf32>
    %13 = arith.maximumf %10, %12 : vector<1x256xf32>
    %c0_10 = arith.constant 0 : index
    %c0_11 = arith.constant 0 : index
    %14 = vector.load %arg7[%c0_10, %c0_11] : memref<1x256xf32, #tpu.memory_space<vmem>>, vector<1x256xf32>
    tpu.vector_store %arg7[%c0_10, %c0_11], %13 {strides = array<i32>} : memref<1x256xf32, #tpu.memory_space<vmem>>, vector<1x256xf32>,
    %c0_i32_12 = arith.constant 0 : i32
    %15 = arith.cmpi eq, %arg1, %c0_i32_12 : i32
    %16 = arith.extui %15 : i1 to i32
    %c0_i32_13 = arith.constant 0 : i32
    %17 = arith.cmpi ne, %16, %c0_i32_13 : i32
    scf.if %17 {
      %c0_14 = arith.constant 0 : index
      %18 = memref.load %arg3[%c0_14] : memref<1xf32, #tpu.memory_space<smem>>
      %cst_15 = arith.constant 0.000000e+00 : f32
      %19 = vector.broadcast %cst_15 : f32 to vector<3x16xf32>
      %c0_16 = arith.constant 0 : index
      %c0_17 = arith.constant 0 : index
      %c0_18 = arith.constant 0 : index
      %20 = vector.load %arg8[%c0_16, %c0_17, %c0_18] : memref<2x24x16xf32, #tpu.memory_space<vmem>>, vector<1x3x16xf32>
      %21 = vector.shape_cast %20 : vector<1x3x16xf32> to vector<3x16xf32>
      %22 = vector.shape_cast %19 : vector<3x16xf32> to vector<1x3x16xf32>
      tpu.vector_store %arg8[%c0_16, %c0_17, %c0_18], %22 {strides = array<i32>} : memref<2x24x16xf32, #tpu.memory_space<vmem>>, vector<1x3x16xf32>,
      %cst_19 = arith.constant 0.000000e+00 : f32
      %23 = vector.broadcast %cst_19 : f32 to vector<5x16xf32>
      %c0_20 = arith.constant 0 : index
      %c19 = arith.constant 19 : index
      %c0_21 = arith.constant 0 : index
      %24 = vector.load %arg8[%c0_20, %c19, %c0_21] : memref<2x24x16xf32, #tpu.memory_space<vmem>>, vector<1x5x16xf32>
      %25 = vector.shape_cast %24 : vector<1x5x16xf32> to vector<5x16xf32>
      %26 = vector.shape_cast %23 : vector<5x16xf32> to vector<1x5x16xf32>
      tpu.vector_store %arg8[%c0_20, %c19, %c0_21], %26 {strides = array<i32>} : memref<2x24x16xf32, #tpu.memory_space<vmem>>, vector<1x5x16xf32>,
      %cst_22 = arith.constant 0.000000e+00 : f32
      %27 = vector.broadcast %cst_22 : f32 to vector<3x16xf32>
      %c1 = arith.constant 1 : index
      %c0_23 = arith.constant 0 : index
      %c0_24 = arith.constant 0 : index
      %28 = vector.load %arg8[%c1, %c0_23, %c0_24] : memref<2x24x16xf32, #tpu.memory_space<vmem>>, vector<1x3x16xf32>
      %29 = vector.shape_cast %28 : vector<1x3x16xf32> to vector<3x16xf32>
      %30 = vector.shape_cast %27 : vector<3x16xf32> to vector<1x3x16xf32>
      tpu.vector_store %arg8[%c1, %c0_23, %c0_24], %30 {strides = array<i32>} : memref<2x24x16xf32, #tpu.memory_space<vmem>>, vector<1x3x16xf32>,
      %cst_25 = arith.constant 0.000000e+00 : f32
      %31 = vector.broadcast %cst_25 : f32 to vector<5x16xf32>
      %c1_26 = arith.constant 1 : index
      %c19_27 = arith.constant 19 : index
      %c0_28 = arith.constant 0 : index
      %32 = vector.load %arg8[%c1_26, %c19_27, %c0_28] : memref<2x24x16xf32, #tpu.memory_space<vmem>>, vector<1x5x16xf32>
      %33 = vector.shape_cast %32 : vector<1x5x16xf32> to vector<5x16xf32>
      %34 = vector.shape_cast %31 : vector<5x16xf32> to vector<1x5x16xf32>
      tpu.vector_store %arg8[%c1_26, %c19_27, %c0_28], %34 {strides = array<i32>} : memref<2x24x16xf32, #tpu.memory_space<vmem>>, vector<1x5x16xf32>,
      %c0_29 = arith.constant 0 : index
      %c0_30 = arith.constant 0 : index
      %35 = vector.load %arg6[%c0_29, %c0_30] : memref<1x256xf32, #tpu.memory_space<vmem>>, vector<1x16xf32>
      %c0_31 = arith.constant 0 : index
      %c3 = arith.constant 3 : index
      %c0_32 = arith.constant 0 : index
      %36 = vector.load %arg8[%c0_31, %c3, %c0_32] : memref<2x24x16xf32, #tpu.memory_space<vmem>>, vector<1x1x16xf32>
      %37 = vector.shape_cast %36 : vector<1x1x16xf32> to vector<1x16xf32>
      %38 = vector.shape_cast %35 : vector<1x16xf32> to vector<1x1x16xf32>
      tpu.vector_store %arg8[%c0_31, %c3, %c0_32], %38 {strides = array<i32>} : memref<2x24x16xf32, #tpu.memory_space<vmem>>, vector<1x1x16xf32>,
      %c0_33 = arith.constant 0 : index
      %c0_34 = arith.constant 0 : index
      %39 = vector.load %arg7[%c0_33, %c0_34] : memref<1x256xf32, #tpu.memory_space<vmem>>, vector<1x16xf32>
      %c1_35 = arith.constant 1 : index
      %c3_36 = arith.constant 3 : index
      %c0_37 = arith.constant 0 : index
      %40 = vector.load %arg8[%c1_35, %c3_36, %c0_37] : memref<2x24x16xf32, #tpu.memory_space<vmem>>, vector<1x1x16xf32>
      %41 = vector.shape_cast %40 : vector<1x1x16xf32> to vector<1x16xf32>
      %42 = vector.shape_cast %39 : vector<1x16xf32> to vector<1x1x16xf32>
      tpu.vector_store %arg8[%c1_35, %c3_36, %c0_37], %42 {strides = array<i32>} : memref<2x24x16xf32, #tpu.memory_space<vmem>>, vector<1x1x16xf32>,
      %c0_38 = arith.constant 0 : index
      %c16 = arith.constant 16 : index
      %43 = vector.load %arg6[%c0_38, %c16] : memref<1x256xf32, #tpu.memory_space<vmem>>, vector<1x16xf32>
      %c0_39 = arith.constant 0 : index
      %c4 = arith.constant 4 : index
      %c0_40 = arith.constant 0 : index
      %44 = vector.load %arg8[%c0_39, %c4, %c0_40] : memref<2x24x16xf32, #tpu.memory_space<vmem>>, vector<1x1x16xf32>
      %45 = vector.shape_cast %44 : vector<1x1x16xf32> to vector<1x16xf32>
      %46 = vector.shape_cast %43 : vector<1x16xf32> to vector<1x1x16xf32>
      tpu.vector_store %arg8[%c0_39, %c4, %c0_40], %46 {strides = array<i32>} : memref<2x24x16xf32, #tpu.memory_space<vmem>>, vector<1x1x16xf32>,
      %c0_41 = arith.constant 0 : index
      %c16_42 = arith.constant 16 : index
      %47 = vector.load %arg7[%c0_41, %c16_42] : memref<1x256xf32, #tpu.memory_space<vmem>>, vector<1x16xf32>
      %c1_43 = arith.constant 1 : index
      %c4_44 = arith.constant 4 : index
      %c0_45 = arith.constant 0 : index
      %48 = vector.load %arg8[%c1_43, %c4_44, %c0_45] : memref<2x24x16xf32, #tpu.memory_space<vmem>>, vector<1x1x16xf32>
      %49 = vector.shape_cast %48 : vector<1x1x16xf32> to vector<1x16xf32>
      %50 = vector.shape_cast %47 : vector<1x16xf32> to vector<1x1x16xf32>
      tpu.vector_store %arg8[%c1_43, %c4_44, %c0_45], %50 {strides = array<i32>} : memref<2x24x16xf32, #tpu.memory_space<vmem>>, vector<1x1x16xf32>,
      %c0_46 = arith.constant 0 : index
      %c32 = arith.constant 32 : index
      %51 = vector.load %arg6[%c0_46, %c32] : memref<1x256xf32, #tpu.memory_space<vmem>>, vector<1x16xf32>
      %c0_47 = arith.constant 0 : index
      %c5 = arith.constant 5 : index
      %c0_48 = arith.constant 0 : index
      %52 = vector.load %arg8[%c0_47, %c5, %c0_48] : memref<2x24x16xf32, #tpu.memory_space<vmem>>, vector<1x1x16xf32>
      %53 = vector.shape_cast %52 : vector<1x1x16xf32> to vector<1x16xf32>
      %54 = vector.shape_cast %51 : vector<1x16xf32> to vector<1x1x16xf32>
      tpu.vector_store %arg8[%c0_47, %c5, %c0_48], %54 {strides = array<i32>} : memref<2x24x16xf32, #tpu.memory_space<vmem>>, vector<1x1x16xf32>,
      %c0_49 = arith.constant 0 : index
      %c32_50 = arith.constant 32 : index
      %55 = vector.load %arg7[%c0_49, %c32_50] : memref<1x256xf32, #tpu.memory_space<vmem>>, vector<1x16xf32>
      %c1_51 = arith.constant 1 : index
      %c5_52 = arith.constant 5 : index
      %c0_53 = arith.constant 0 : index
      %56 = vector.load %arg8[%c1_51, %c5_52, %c0_53] : memref<2x24x16xf32, #tpu.memory_space<vmem>>, vector<1x1x16xf32>
      %57 = vector.shape_cast %56 : vector<1x1x16xf32> to vector<1x16xf32>
      %58 = vector.shape_cast %55 : vector<1x16xf32> to vector<1x1x16xf32>
      tpu.vector_store %arg8[%c1_51, %c5_52, %c0_53], %58 {strides = array<i32>} : memref<2x24x16xf32, #tpu.memory_space<vmem>>, vector<1x1x16xf32>,
      %c0_54 = arith.constant 0 : index
      %c48 = arith.constant 48 : index
      %59 = vector.load %arg6[%c0_54, %c48] : memref<1x256xf32, #tpu.memory_space<vmem>>, vector<1x16xf32>
      %c0_55 = arith.constant 0 : index
      %c6 = arith.constant 6 : index
      %c0_56 = arith.constant 0 : index
      %60 = vector.load %arg8[%c0_55, %c6, %c0_56] : memref<2x24x16xf32, #tpu.memory_space<vmem>>, vector<1x1x16xf32>
      %61 = vector.shape_cast %60 : vector<1x1x16xf32> to vector<1x16xf32>
      %62 = vector.shape_cast %59 : vector<1x16xf32> to vector<1x1x16xf32>
      tpu.vector_store %arg8[%c0_55, %c6, %c0_56], %62 {strides = array<i32>} : memref<2x24x16xf32, #tpu.memory_space<vmem>>, vector<1x1x16xf32>,
      %c0_57 = arith.constant 0 : index
      %c48_58 = arith.constant 48 : index
      %63 = vector.load %arg7[%c0_57, %c48_58] : memref<1x256xf32, #tpu.memory_space<vmem>>, vector<1x16xf32>
      %c1_59 = arith.constant 1 : index
      %c6_60 = arith.constant 6 : index
      %c0_61 = arith.constant 0 : index
      %64 = vector.load %arg8[%c1_59, %c6_60, %c0_61] : memref<2x24x16xf32, #tpu.memory_space<vmem>>, vector<1x1x16xf32>
      %65 = vector.shape_cast %64 : vector<1x1x16xf32> to vector<1x16xf32>
      %66 = vector.shape_cast %63 : vector<1x16xf32> to vector<1x1x16xf32>
      tpu.vector_store %arg8[%c1_59, %c6_60, %c0_61], %66 {strides = array<i32>} : memref<2x24x16xf32, #tpu.memory_space<vmem>>, vector<1x1x16xf32>,
      %c0_62 = arith.constant 0 : index
      %c64 = arith.constant 64 : index
      %67 = vector.load %arg6[%c0_62, %c64] : memref<1x256xf32, #tpu.memory_space<vmem>>, vector<1x16xf32>
      %c0_63 = arith.constant 0 : index
      %c7 = arith.constant 7 : index
      %c0_64 = arith.constant 0 : index
      %68 = vector.load %arg8[%c0_63, %c7, %c0_64] : memref<2x24x16xf32, #tpu.memory_space<vmem>>, vector<1x1x16xf32>
      %69 = vector.shape_cast %68 : vector<1x1x16xf32> to vector<1x16xf32>
      %70 = vector.shape_cast %67 : vector<1x16xf32> to vector<1x1x16xf32>
      tpu.vector_store %arg8[%c0_63, %c7, %c0_64], %70 {strides = array<i32>} : memref<2x24x16xf32, #tpu.memory_space<vmem>>, vector<1x1x16xf32>,
      %c0_65 = arith.constant 0 : index
      %c64_66 = arith.constant 64 : index
      %71 = vector.load %arg7[%c0_65, %c64_66] : memref<1x256xf32, #tpu.memory_space<vmem>>, vector<1x16xf32>
      %c1_67 = arith.constant 1 : index
      %c7_68 = arith.constant 7 : index
      %c0_69 = arith.constant 0 : index
      %72 = vector.load %arg8[%c1_67, %c7_68, %c0_69] : memref<2x24x16xf32, #tpu.memory_space<vmem>>, vector<1x1x16xf32>
      %73 = vector.shape_cast %72 : vector<1x1x16xf32> to vector<1x16xf32>
      %74 = vector.shape_cast %71 : vector<1x16xf32> to vector<1x1x16xf32>
      tpu.vector_store %arg8[%c1_67, %c7_68, %c0_69], %74 {strides = array<i32>} : memref<2x24x16xf32, #tpu.memory_space<vmem>>, vector<1x1x16xf32>,
      %c0_70 = arith.constant 0 : index
      %c80 = arith.constant 80 : index
      %75 = vector.load %arg6[%c0_70, %c80] : memref<1x256xf32, #tpu.memory_space<vmem>>, vector<1x16xf32>
      %c0_71 = arith.constant 0 : index
      %c8 = arith.constant 8 : index
      %c0_72 = arith.constant 0 : index
      %76 = vector.load %arg8[%c0_71, %c8, %c0_72] : memref<2x24x16xf32, #tpu.memory_space<vmem>>, vector<1x1x16xf32>
      %77 = vector.shape_cast %76 : vector<1x1x16xf32> to vector<1x16xf32>
      %78 = vector.shape_cast %75 : vector<1x16xf32> to vector<1x1x16xf32>
      tpu.vector_store %arg8[%c0_71, %c8, %c0_72], %78 {strides = array<i32>} : memref<2x24x16xf32, #tpu.memory_space<vmem>>, vector<1x1x16xf32>,
      %c0_73 = arith.constant 0 : index
      %c80_74 = arith.constant 80 : index
      %79 = vector.load %arg7[%c0_73, %c80_74] : memref<1x256xf32, #tpu.memory_space<vmem>>, vector<1x16xf32>
      %c1_75 = arith.constant 1 : index
      %c8_76 = arith.constant 8 : index
      %c0_77 = arith.constant 0 : index
      %80 = vector.load %arg8[%c1_75, %c8_76, %c0_77] : memref<2x24x16xf32, #tpu.memory_space<vmem>>, vector<1x1x16xf32>
      %81 = vector.shape_cast %80 : vector<1x1x16xf32> to vector<1x16xf32>
      %82 = vector.shape_cast %79 : vector<1x16xf32> to vector<1x1x16xf32>
      tpu.vector_store %arg8[%c1_75, %c8_76, %c0_77], %82 {strides = array<i32>} : memref<2x24x16xf32, #tpu.memory_space<vmem>>, vector<1x1x16xf32>,
      %c0_78 = arith.constant 0 : index
      %c96 = arith.constant 96 : index
      %83 = vector.load %arg6[%c0_78, %c96] : memref<1x256xf32, #tpu.memory_space<vmem>>, vector<1x16xf32>
      %c0_79 = arith.constant 0 : index
      %c9 = arith.constant 9 : index
      %c0_80 = arith.constant 0 : index
      %84 = vector.load %arg8[%c0_79, %c9, %c0_80] : memref<2x24x16xf32, #tpu.memory_space<vmem>>, vector<1x1x16xf32>
      %85 = vector.shape_cast %84 : vector<1x1x16xf32> to vector<1x16xf32>
      %86 = vector.shape_cast %83 : vector<1x16xf32> to vector<1x1x16xf32>
      tpu.vector_store %arg8[%c0_79, %c9, %c0_80], %86 {strides = array<i32>} : memref<2x24x16xf32, #tpu.memory_space<vmem>>, vector<1x1x16xf32>,
      %c0_81 = arith.constant 0 : index
      %c96_82 = arith.constant 96 : index
      %87 = vector.load %arg7[%c0_81, %c96_82] : memref<1x256xf32, #tpu.memory_space<vmem>>, vector<1x16xf32>
      %c1_83 = arith.constant 1 : index
      %c9_84 = arith.constant 9 : index
      %c0_85 = arith.constant 0 : index
      %88 = vector.load %arg8[%c1_83, %c9_84, %c0_85] : memref<2x24x16xf32, #tpu.memory_space<vmem>>, vector<1x1x16xf32>
      %89 = vector.shape_cast %88 : vector<1x1x16xf32> to vector<1x16xf32>
      %90 = vector.shape_cast %87 : vector<1x16xf32> to vector<1x1x16xf32>
      tpu.vector_store %arg8[%c1_83, %c9_84, %c0_85], %90 {strides = array<i32>} : memref<2x24x16xf32, #tpu.memory_space<vmem>>, vector<1x1x16xf32>,
      %c0_86 = arith.constant 0 : index
      %c112 = arith.constant 112 : index
      %91 = vector.load %arg6[%c0_86, %c112] : memref<1x256xf32, #tpu.memory_space<vmem>>, vector<1x16xf32>
      %c0_87 = arith.constant 0 : index
      %c10 = arith.constant 10 : index
      %c0_88 = arith.constant 0 : index
      %92 = vector.load %arg8[%c0_87, %c10, %c0_88] : memref<2x24x16xf32, #tpu.memory_space<vmem>>, vector<1x1x16xf32>
      %93 = vector.shape_cast %92 : vector<1x1x16xf32> to vector<1x16xf32>
      %94 = vector.shape_cast %91 : vector<1x16xf32> to vector<1x1x16xf32>
      tpu.vector_store %arg8[%c0_87, %c10, %c0_88], %94 {strides = array<i32>} : memref<2x24x16xf32, #tpu.memory_space<vmem>>, vector<1x1x16xf32>,
      %c0_89 = arith.constant 0 : index
      %c112_90 = arith.constant 112 : index
      %95 = vector.load %arg7[%c0_89, %c112_90] : memref<1x256xf32, #tpu.memory_space<vmem>>, vector<1x16xf32>
      %c1_91 = arith.constant 1 : index
      %c10_92 = arith.constant 10 : index
      %c0_93 = arith.constant 0 : index
      %96 = vector.load %arg8[%c1_91, %c10_92, %c0_93] : memref<2x24x16xf32, #tpu.memory_space<vmem>>, vector<1x1x16xf32>
      %97 = vector.shape_cast %96 : vector<1x1x16xf32> to vector<1x16xf32>
      %98 = vector.shape_cast %95 : vector<1x16xf32> to vector<1x1x16xf32>
      tpu.vector_store %arg8[%c1_91, %c10_92, %c0_93], %98 {strides = array<i32>} : memref<2x24x16xf32, #tpu.memory_space<vmem>>, vector<1x1x16xf32>,
      %c0_94 = arith.constant 0 : index
      %c128 = arith.constant 128 : index
      %99 = vector.load %arg6[%c0_94, %c128] : memref<1x256xf32, #tpu.memory_space<vmem>>, vector<1x16xf32>
      %c0_95 = arith.constant 0 : index
      %c11 = arith.constant 11 : index
      %c0_96 = arith.constant 0 : index
      %100 = vector.load %arg8[%c0_95, %c11, %c0_96] : memref<2x24x16xf32, #tpu.memory_space<vmem>>, vector<1x1x16xf32>
      %101 = vector.shape_cast %100 : vector<1x1x16xf32> to vector<1x16xf32>
      %102 = vector.shape_cast %99 : vector<1x16xf32> to vector<1x1x16xf32>
      tpu.vector_store %arg8[%c0_95, %c11, %c0_96], %102 {strides = array<i32>} : memref<2x24x16xf32, #tpu.memory_space<vmem>>, vector<1x1x16xf32>,
      %c0_97 = arith.constant 0 : index
      %c128_98 = arith.constant 128 : index
      %103 = vector.load %arg7[%c0_97, %c128_98] : memref<1x256xf32, #tpu.memory_space<vmem>>, vector<1x16xf32>
      %c1_99 = arith.constant 1 : index
      %c11_100 = arith.constant 11 : index
      %c0_101 = arith.constant 0 : index
      %104 = vector.load %arg8[%c1_99, %c11_100, %c0_101] : memref<2x24x16xf32, #tpu.memory_space<vmem>>, vector<1x1x16xf32>
      %105 = vector.shape_cast %104 : vector<1x1x16xf32> to vector<1x16xf32>
      %106 = vector.shape_cast %103 : vector<1x16xf32> to vector<1x1x16xf32>
      tpu.vector_store %arg8[%c1_99, %c11_100, %c0_101], %106 {strides = array<i32>} : memref<2x24x16xf32, #tpu.memory_space<vmem>>, vector<1x1x16xf32>,
      %c0_102 = arith.constant 0 : index
      %c144 = arith.constant 144 : index
      %107 = vector.load %arg6[%c0_102, %c144] : memref<1x256xf32, #tpu.memory_space<vmem>>, vector<1x16xf32>
      %c0_103 = arith.constant 0 : index
      %c12 = arith.constant 12 : index
      %c0_104 = arith.constant 0 : index
      %108 = vector.load %arg8[%c0_103, %c12, %c0_104] : memref<2x24x16xf32, #tpu.memory_space<vmem>>, vector<1x1x16xf32>
      %109 = vector.shape_cast %108 : vector<1x1x16xf32> to vector<1x16xf32>
      %110 = vector.shape_cast %107 : vector<1x16xf32> to vector<1x1x16xf32>
      tpu.vector_store %arg8[%c0_103, %c12, %c0_104], %110 {strides = array<i32>} : memref<2x24x16xf32, #tpu.memory_space<vmem>>, vector<1x1x16xf32>,
      %c0_105 = arith.constant 0 : index
      %c144_106 = arith.constant 144 : index
      %111 = vector.load %arg7[%c0_105, %c144_106] : memref<1x256xf32, #tpu.memory_space<vmem>>, vector<1x16xf32>
      %c1_107 = arith.constant 1 : index
      %c12_108 = arith.constant 12 : index
      %c0_109 = arith.constant 0 : index
      %112 = vector.load %arg8[%c1_107, %c12_108, %c0_109] : memref<2x24x16xf32, #tpu.memory_space<vmem>>, vector<1x1x16xf32>
      %113 = vector.shape_cast %112 : vector<1x1x16xf32> to vector<1x16xf32>
      %114 = vector.shape_cast %111 : vector<1x16xf32> to vector<1x1x16xf32>
      tpu.vector_store %arg8[%c1_107, %c12_108, %c0_109], %114 {strides = array<i32>} : memref<2x24x16xf32, #tpu.memory_space<vmem>>, vector<1x1x16xf32>,
      %c0_110 = arith.constant 0 : index
      %c160 = arith.constant 160 : index
      %115 = vector.load %arg6[%c0_110, %c160] : memref<1x256xf32, #tpu.memory_space<vmem>>, vector<1x16xf32>
      %c0_111 = arith.constant 0 : index
      %c13 = arith.constant 13 : index
      %c0_112 = arith.constant 0 : index
      %116 = vector.load %arg8[%c0_111, %c13, %c0_112] : memref<2x24x16xf32, #tpu.memory_space<vmem>>, vector<1x1x16xf32>
      %117 = vector.shape_cast %116 : vector<1x1x16xf32> to vector<1x16xf32>
      %118 = vector.shape_cast %115 : vector<1x16xf32> to vector<1x1x16xf32>
      tpu.vector_store %arg8[%c0_111, %c13, %c0_112], %118 {strides = array<i32>} : memref<2x24x16xf32, #tpu.memory_space<vmem>>, vector<1x1x16xf32>,
      %c0_113 = arith.constant 0 : index
      %c160_114 = arith.constant 160 : index
      %119 = vector.load %arg7[%c0_113, %c160_114] : memref<1x256xf32, #tpu.memory_space<vmem>>, vector<1x16xf32>
      %c1_115 = arith.constant 1 : index
      %c13_116 = arith.constant 13 : index
      %c0_117 = arith.constant 0 : index
      %120 = vector.load %arg8[%c1_115, %c13_116, %c0_117] : memref<2x24x16xf32, #tpu.memory_space<vmem>>, vector<1x1x16xf32>
      %121 = vector.shape_cast %120 : vector<1x1x16xf32> to vector<1x16xf32>
      %122 = vector.shape_cast %119 : vector<1x16xf32> to vector<1x1x16xf32>
      tpu.vector_store %arg8[%c1_115, %c13_116, %c0_117], %122 {strides = array<i32>} : memref<2x24x16xf32, #tpu.memory_space<vmem>>, vector<1x1x16xf32>,
      %c0_118 = arith.constant 0 : index
      %c176 = arith.constant 176 : index
      %123 = vector.load %arg6[%c0_118, %c176] : memref<1x256xf32, #tpu.memory_space<vmem>>, vector<1x16xf32>
      %c0_119 = arith.constant 0 : index
      %c14 = arith.constant 14 : index
      %c0_120 = arith.constant 0 : index
      %124 = vector.load %arg8[%c0_119, %c14, %c0_120] : memref<2x24x16xf32, #tpu.memory_space<vmem>>, vector<1x1x16xf32>
      %125 = vector.shape_cast %124 : vector<1x1x16xf32> to vector<1x16xf32>
      %126 = vector.shape_cast %123 : vector<1x16xf32> to vector<1x1x16xf32>
      tpu.vector_store %arg8[%c0_119, %c14, %c0_120], %126 {strides = array<i32>} : memref<2x24x16xf32, #tpu.memory_space<vmem>>, vector<1x1x16xf32>,
      %c0_121 = arith.constant 0 : index
      %c176_122 = arith.constant 176 : index
      %127 = vector.load %arg7[%c0_121, %c176_122] : memref<1x256xf32, #tpu.memory_space<vmem>>, vector<1x16xf32>
      %c1_123 = arith.constant 1 : index
      %c14_124 = arith.constant 14 : index
      %c0_125 = arith.constant 0 : index
      %128 = vector.load %arg8[%c1_123, %c14_124, %c0_125] : memref<2x24x16xf32, #tpu.memory_space<vmem>>, vector<1x1x16xf32>
      %129 = vector.shape_cast %128 : vector<1x1x16xf32> to vector<1x16xf32>
      %130 = vector.shape_cast %127 : vector<1x16xf32> to vector<1x1x16xf32>
      tpu.vector_store %arg8[%c1_123, %c14_124, %c0_125], %130 {strides = array<i32>} : memref<2x24x16xf32, #tpu.memory_space<vmem>>, vector<1x1x16xf32>,
      %c0_126 = arith.constant 0 : index
      %c192 = arith.constant 192 : index
      %131 = vector.load %arg6[%c0_126, %c192] : memref<1x256xf32, #tpu.memory_space<vmem>>, vector<1x16xf32>
      %c0_127 = arith.constant 0 : index
      %c15 = arith.constant 15 : index
      %c0_128 = arith.constant 0 : index
      %132 = vector.load %arg8[%c0_127, %c15, %c0_128] : memref<2x24x16xf32, #tpu.memory_space<vmem>>, vector<1x1x16xf32>
      %133 = vector.shape_cast %132 : vector<1x1x16xf32> to vector<1x16xf32>
      %134 = vector.shape_cast %131 : vector<1x16xf32> to vector<1x1x16xf32>
      tpu.vector_store %arg8[%c0_127, %c15, %c0_128], %134 {strides = array<i32>} : memref<2x24x16xf32, #tpu.memory_space<vmem>>, vector<1x1x16xf32>,
      %c0_129 = arith.constant 0 : index
      %c192_130 = arith.constant 192 : index
      %135 = vector.load %arg7[%c0_129, %c192_130] : memref<1x256xf32, #tpu.memory_space<vmem>>, vector<1x16xf32>
      %c1_131 = arith.constant 1 : index
      %c15_132 = arith.constant 15 : index
      %c0_133 = arith.constant 0 : index
      %136 = vector.load %arg8[%c1_131, %c15_132, %c0_133] : memref<2x24x16xf32, #tpu.memory_space<vmem>>, vector<1x1x16xf32>
      %137 = vector.shape_cast %136 : vector<1x1x16xf32> to vector<1x16xf32>
      %138 = vector.shape_cast %135 : vector<1x16xf32> to vector<1x1x16xf32>
      tpu.vector_store %arg8[%c1_131, %c15_132, %c0_133], %138 {strides = array<i32>} : memref<2x24x16xf32, #tpu.memory_space<vmem>>, vector<1x1x16xf32>,
      %c0_134 = arith.constant 0 : index
      %c208 = arith.constant 208 : index
      %139 = vector.load %arg6[%c0_134, %c208] : memref<1x256xf32, #tpu.memory_space<vmem>>, vector<1x16xf32>
      %c0_135 = arith.constant 0 : index
      %c16_136 = arith.constant 16 : index
      %c0_137 = arith.constant 0 : index
      %140 = vector.load %arg8[%c0_135, %c16_136, %c0_137] : memref<2x24x16xf32, #tpu.memory_space<vmem>>, vector<1x1x16xf32>
      %141 = vector.shape_cast %140 : vector<1x1x16xf32> to vector<1x16xf32>
      %142 = vector.shape_cast %139 : vector<1x16xf32> to vector<1x1x16xf32>
      tpu.vector_store %arg8[%c0_135, %c16_136, %c0_137], %142 {strides = array<i32>} : memref<2x24x16xf32, #tpu.memory_space<vmem>>, vector<1x1x16xf32>,
      %c0_138 = arith.constant 0 : index
      %c208_139 = arith.constant 208 : index
      %143 = vector.load %arg7[%c0_138, %c208_139] : memref<1x256xf32, #tpu.memory_space<vmem>>, vector<1x16xf32>
      %c1_140 = arith.constant 1 : index
      %c16_141 = arith.constant 16 : index
      %c0_142 = arith.constant 0 : index
      %144 = vector.load %arg8[%c1_140, %c16_141, %c0_142] : memref<2x24x16xf32, #tpu.memory_space<vmem>>, vector<1x1x16xf32>
      %145 = vector.shape_cast %144 : vector<1x1x16xf32> to vector<1x16xf32>
      %146 = vector.shape_cast %143 : vector<1x16xf32> to vector<1x1x16xf32>
      tpu.vector_store %arg8[%c1_140, %c16_141, %c0_142], %146 {strides = array<i32>} : memref<2x24x16xf32, #tpu.memory_space<vmem>>, vector<1x1x16xf32>,
      %c0_143 = arith.constant 0 : index
      %c224 = arith.constant 224 : index
      %147 = vector.load %arg6[%c0_143, %c224] : memref<1x256xf32, #tpu.memory_space<vmem>>, vector<1x16xf32>
      %c0_144 = arith.constant 0 : index
      %c17 = arith.constant 17 : index
      %c0_145 = arith.constant 0 : index
      %148 = vector.load %arg8[%c0_144, %c17, %c0_145] : memref<2x24x16xf32, #tpu.memory_space<vmem>>, vector<1x1x16xf32>
      %149 = vector.shape_cast %148 : vector<1x1x16xf32> to vector<1x16xf32>
      %150 = vector.shape_cast %147 : vector<1x16xf32> to vector<1x1x16xf32>
      tpu.vector_store %arg8[%c0_144, %c17, %c0_145], %150 {strides = array<i32>} : memref<2x24x16xf32, #tpu.memory_space<vmem>>, vector<1x1x16xf32>,
      %c0_146 = arith.constant 0 : index
      %c224_147 = arith.constant 224 : index
      %151 = vector.load %arg7[%c0_146, %c224_147] : memref<1x256xf32, #tpu.memory_space<vmem>>, vector<1x16xf32>
      %c1_148 = arith.constant 1 : index
      %c17_149 = arith.constant 17 : index
      %c0_150 = arith.constant 0 : index
      %152 = vector.load %arg8[%c1_148, %c17_149, %c0_150] : memref<2x24x16xf32, #tpu.memory_space<vmem>>, vector<1x1x16xf32>
      %153 = vector.shape_cast %152 : vector<1x1x16xf32> to vector<1x16xf32>
      %154 = vector.shape_cast %151 : vector<1x16xf32> to vector<1x1x16xf32>
      tpu.vector_store %arg8[%c1_148, %c17_149, %c0_150], %154 {strides = array<i32>} : memref<2x24x16xf32, #tpu.memory_space<vmem>>, vector<1x1x16xf32>,
      %c0_151 = arith.constant 0 : index
      %c240 = arith.constant 240 : index
      %155 = vector.load %arg6[%c0_151, %c240] : memref<1x256xf32, #tpu.memory_space<vmem>>, vector<1x16xf32>
      %c0_152 = arith.constant 0 : index
      %c18 = arith.constant 18 : index
      %c0_153 = arith.constant 0 : index
      %156 = vector.load %arg8[%c0_152, %c18, %c0_153] : memref<2x24x16xf32, #tpu.memory_space<vmem>>, vector<1x1x16xf32>
      %157 = vector.shape_cast %156 : vector<1x1x16xf32> to vector<1x16xf32>
      %158 = vector.shape_cast %155 : vector<1x16xf32> to vector<1x1x16xf32>
      tpu.vector_store %arg8[%c0_152, %c18, %c0_153], %158 {strides = array<i32>} : memref<2x24x16xf32, #tpu.memory_space<vmem>>, vector<1x1x16xf32>,
      %c0_154 = arith.constant 0 : index
      %c240_155 = arith.constant 240 : index
      %159 = vector.load %arg7[%c0_154, %c240_155] : memref<1x256xf32, #tpu.memory_space<vmem>>, vector<1x16xf32>
      %c1_156 = arith.constant 1 : index
      %c18_157 = arith.constant 18 : index
      %c0_158 = arith.constant 0 : index
      %160 = vector.load %arg8[%c1_156, %c18_157, %c0_158] : memref<2x24x16xf32, #tpu.memory_space<vmem>>, vector<1x1x16xf32>
      %161 = vector.shape_cast %160 : vector<1x1x16xf32> to vector<1x16xf32>
      %162 = vector.shape_cast %159 : vector<1x16xf32> to vector<1x1x16xf32>
      tpu.vector_store %arg8[%c1_156, %c18_157, %c0_158], %162 {strides = array<i32>} : memref<2x24x16xf32, #tpu.memory_space<vmem>>, vector<1x1x16xf32>,
      %c0_159 = arith.constant 0 : index
      %c0_160 = arith.constant 0 : index
      %c0_161 = arith.constant 0 : index
      %163 = vector.load %arg8[%c0_159, %c0_160, %c0_161] : memref<2x24x16xf32, #tpu.memory_space<vmem>>, vector<1x16x16xf32>
      %164 = vector.shape_cast %163 : vector<1x16x16xf32> to vector<16x16xf32>
      %c0_162 = arith.constant 0 : index
      %c0_163 = arith.constant 0 : index
      %165 = vector.load %arg9[%c0_162, %c0_163] : memref<16x224xf32, #tpu.memory_space<vmem>>, vector<16x16xf32>
      tpu.vector_store %arg9[%c0_162, %c0_163], %164 {strides = array<i32>} : memref<16x224xf32, #tpu.memory_space<vmem>>, vector<16x16xf32>,
      %c0_164 = arith.constant 0 : index
      %c1_165 = arith.constant 1 : index
      %c0_166 = arith.constant 0 : index
      %166 = vector.load %arg8[%c0_164, %c1_165, %c0_166] : memref<2x24x16xf32, #tpu.memory_space<vmem>>, vector<1x16x16xf32>
      %167 = vector.shape_cast %166 : vector<1x16x16xf32> to vector<16x16xf32>
      %c0_167 = arith.constant 0 : index
      %c16_168 = arith.constant 16 : index
      %168 = vector.load %arg9[%c0_167, %c16_168] : memref<16x224xf32, #tpu.memory_space<vmem>>, vector<16x16xf32>
      tpu.vector_store %arg9[%c0_167, %c16_168], %167 {strides = array<i32>} : memref<16x224xf32, #tpu.memory_space<vmem>>, vector<16x16xf32>,
      %c0_169 = arith.constant 0 : index
      %c2 = arith.constant 2 : index
      %c0_170 = arith.constant 0 : index
      %169 = vector.load %arg8[%c0_169, %c2, %c0_170] : memref<2x24x16xf32, #tpu.memory_space<vmem>>, vector<1x16x16xf32>
      %170 = vector.shape_cast %169 : vector<1x16x16xf32> to vector<16x16xf32>
      %c0_171 = arith.constant 0 : index
      %c32_172 = arith.constant 32 : index
      %171 = vector.load %arg9[%c0_171, %c32_172] : memref<16x224xf32, #tpu.memory_space<vmem>>, vector<16x16xf32>
      tpu.vector_store %arg9[%c0_171, %c32_172], %170 {strides = array<i32>} : memref<16x224xf32, #tpu.memory_space<vmem>>, vector<16x16xf32>,
      %c0_173 = arith.constant 0 : index
      %c3_174 = arith.constant 3 : index
      %c0_175 = arith.constant 0 : index
      %172 = vector.load %arg8[%c0_173, %c3_174, %c0_175] : memref<2x24x16xf32, #tpu.memory_space<vmem>>, vector<1x16x16xf32>
      %173 = vector.shape_cast %172 : vector<1x16x16xf32> to vector<16x16xf32>
      %c0_176 = arith.constant 0 : index
      %c48_177 = arith.constant 48 : index
      %174 = vector.load %arg9[%c0_176, %c48_177] : memref<16x224xf32, #tpu.memory_space<vmem>>, vector<16x16xf32>
      tpu.vector_store %arg9[%c0_176, %c48_177], %173 {strides = array<i32>} : memref<16x224xf32, #tpu.memory_space<vmem>>, vector<16x16xf32>,
      %c0_178 = arith.constant 0 : index
      %c4_179 = arith.constant 4 : index
      %c0_180 = arith.constant 0 : index
      %175 = vector.load %arg8[%c0_178, %c4_179, %c0_180] : memref<2x24x16xf32, #tpu.memory_space<vmem>>, vector<1x16x16xf32>
      %176 = vector.shape_cast %175 : vector<1x16x16xf32> to vector<16x16xf32>
      %c0_181 = arith.constant 0 : index
      %c64_182 = arith.constant 64 : index
      %177 = vector.load %arg9[%c0_181, %c64_182] : memref<16x224xf32, #tpu.memory_space<vmem>>, vector<16x16xf32>
      tpu.vector_store %arg9[%c0_181, %c64_182], %176 {strides = array<i32>} : memref<16x224xf32, #tpu.memory_space<vmem>>, vector<16x16xf32>,
      %c0_183 = arith.constant 0 : index
      %c5_184 = arith.constant 5 : index
      %c0_185 = arith.constant 0 : index
      %178 = vector.load %arg8[%c0_183, %c5_184, %c0_185] : memref<2x24x16xf32, #tpu.memory_space<vmem>>, vector<1x16x16xf32>
      %179 = vector.shape_cast %178 : vector<1x16x16xf32> to vector<16x16xf32>
      %c0_186 = arith.constant 0 : index
      %c80_187 = arith.constant 80 : index
      %180 = vector.load %arg9[%c0_186, %c80_187] : memref<16x224xf32, #tpu.memory_space<vmem>>, vector<16x16xf32>
      tpu.vector_store %arg9[%c0_186, %c80_187], %179 {strides = array<i32>} : memref<16x224xf32, #tpu.memory_space<vmem>>, vector<16x16xf32>,
      %c0_188 = arith.constant 0 : index
      %c6_189 = arith.constant 6 : index
      %c0_190 = arith.constant 0 : index
      %181 = vector.load %arg8[%c0_188, %c6_189, %c0_190] : memref<2x24x16xf32, #tpu.memory_space<vmem>>, vector<1x16x16xf32>
      %182 = vector.shape_cast %181 : vector<1x16x16xf32> to vector<16x16xf32>
      %c0_191 = arith.constant 0 : index
      %c96_192 = arith.constant 96 : index
      %183 = vector.load %arg9[%c0_191, %c96_192] : memref<16x224xf32, #tpu.memory_space<vmem>>, vector<16x16xf32>
      tpu.vector_store %arg9[%c0_191, %c96_192], %182 {strides = array<i32>} : memref<16x224xf32, #tpu.memory_space<vmem>>, vector<16x16xf32>,
      %c1_193 = arith.constant 1 : index
      %c0_194 = arith.constant 0 : index
      %c0_195 = arith.constant 0 : index
      %184 = vector.load %arg8[%c1_193, %c0_194, %c0_195] : memref<2x24x16xf32, #tpu.memory_space<vmem>>, vector<1x16x16xf32>
      %185 = vector.shape_cast %184 : vector<1x16x16xf32> to vector<16x16xf32>
      %c0_196 = arith.constant 0 : index
      %c112_197 = arith.constant 112 : index
      %186 = vector.load %arg9[%c0_196, %c112_197] : memref<16x224xf32, #tpu.memory_space<vmem>>, vector<16x16xf32>
      tpu.vector_store %arg9[%c0_196, %c112_197], %185 {strides = array<i32>} : memref<16x224xf32, #tpu.memory_space<vmem>>, vector<16x16xf32>,
      %c1_198 = arith.constant 1 : index
      %c1_199 = arith.constant 1 : index
      %c0_200 = arith.constant 0 : index
      %187 = vector.load %arg8[%c1_198, %c1_199, %c0_200] : memref<2x24x16xf32, #tpu.memory_space<vmem>>, vector<1x16x16xf32>
      %188 = vector.shape_cast %187 : vector<1x16x16xf32> to vector<16x16xf32>
      %c0_201 = arith.constant 0 : index
      %c128_202 = arith.constant 128 : index
      %189 = vector.load %arg9[%c0_201, %c128_202] : memref<16x224xf32, #tpu.memory_space<vmem>>, vector<16x16xf32>
      tpu.vector_store %arg9[%c0_201, %c128_202], %188 {strides = array<i32>} : memref<16x224xf32, #tpu.memory_space<vmem>>, vector<16x16xf32>,
      %c1_203 = arith.constant 1 : index
      %c2_204 = arith.constant 2 : index
      %c0_205 = arith.constant 0 : index
      %190 = vector.load %arg8[%c1_203, %c2_204, %c0_205] : memref<2x24x16xf32, #tpu.memory_space<vmem>>, vector<1x16x16xf32>
      %191 = vector.shape_cast %190 : vector<1x16x16xf32> to vector<16x16xf32>
      %c0_206 = arith.constant 0 : index
      %c144_207 = arith.constant 144 : index
      %192 = vector.load %arg9[%c0_206, %c144_207] : memref<16x224xf32, #tpu.memory_space<vmem>>, vector<16x16xf32>
      tpu.vector_store %arg9[%c0_206, %c144_207], %191 {strides = array<i32>} : memref<16x224xf32, #tpu.memory_space<vmem>>, vector<16x16xf32>,
      %c1_208 = arith.constant 1 : index
      %c3_209 = arith.constant 3 : index
      %c0_210 = arith.constant 0 : index
      %193 = vector.load %arg8[%c1_208, %c3_209, %c0_210] : memref<2x24x16xf32, #tpu.memory_space<vmem>>, vector<1x16x16xf32>
      %194 = vector.shape_cast %193 : vector<1x16x16xf32> to vector<16x16xf32>
      %c0_211 = arith.constant 0 : index
      %c160_212 = arith.constant 160 : index
      %195 = vector.load %arg9[%c0_211, %c160_212] : memref<16x224xf32, #tpu.memory_space<vmem>>, vector<16x16xf32>
      tpu.vector_store %arg9[%c0_211, %c160_212], %194 {strides = array<i32>} : memref<16x224xf32, #tpu.memory_space<vmem>>, vector<16x16xf32>,
      %c1_213 = arith.constant 1 : index
      %c4_214 = arith.constant 4 : index
      %c0_215 = arith.constant 0 : index
      %196 = vector.load %arg8[%c1_213, %c4_214, %c0_215] : memref<2x24x16xf32, #tpu.memory_space<vmem>>, vector<1x16x16xf32>
      %197 = vector.shape_cast %196 : vector<1x16x16xf32> to vector<16x16xf32>
      %c0_216 = arith.constant 0 : index
      %c176_217 = arith.constant 176 : index
      %198 = vector.load %arg9[%c0_216, %c176_217] : memref<16x224xf32, #tpu.memory_space<vmem>>, vector<16x16xf32>
      tpu.vector_store %arg9[%c0_216, %c176_217], %197 {strides = array<i32>} : memref<16x224xf32, #tpu.memory_space<vmem>>, vector<16x16xf32>,
      %c1_218 = arith.constant 1 : index
      %c5_219 = arith.constant 5 : index
      %c0_220 = arith.constant 0 : index
      %199 = vector.load %arg8[%c1_218, %c5_219, %c0_220] : memref<2x24x16xf32, #tpu.memory_space<vmem>>, vector<1x16x16xf32>
      %200 = vector.shape_cast %199 : vector<1x16x16xf32> to vector<16x16xf32>
      %c0_221 = arith.constant 0 : index
      %c192_222 = arith.constant 192 : index
      %201 = vector.load %arg9[%c0_221, %c192_222] : memref<16x224xf32, #tpu.memory_space<vmem>>, vector<16x16xf32>
      tpu.vector_store %arg9[%c0_221, %c192_222], %200 {strides = array<i32>} : memref<16x224xf32, #tpu.memory_space<vmem>>, vector<16x16xf32>,
      %c1_223 = arith.constant 1 : index
      %c6_224 = arith.constant 6 : index
      %c0_225 = arith.constant 0 : index
      %202 = vector.load %arg8[%c1_223, %c6_224, %c0_225] : memref<2x24x16xf32, #tpu.memory_space<vmem>>, vector<1x16x16xf32>
      %203 = vector.shape_cast %202 : vector<1x16x16xf32> to vector<16x16xf32>
      %c0_226 = arith.constant 0 : index
      %c208_227 = arith.constant 208 : index
      %204 = vector.load %arg9[%c0_226, %c208_227] : memref<16x224xf32, #tpu.memory_space<vmem>>, vector<16x16xf32>
      tpu.vector_store %arg9[%c0_226, %c208_227], %203 {strides = array<i32>} : memref<16x224xf32, #tpu.memory_space<vmem>>, vector<16x16xf32>,
      %c0_228 = arith.constant 0 : index
      %c0_229 = arith.constant 0 : index
      %205 = vector.load %arg9[%c0_228, %c0_229] : memref<16x224xf32, #tpu.memory_space<vmem>>, vector<16x224xf32>
      %206 = arith.truncf %205 : vector<16x224xf32> to vector<16x224xbf16>
      %c0_230 = arith.constant 0 : index
      %c0_231 = arith.constant 0 : index
      %207 = vector.load %arg2[%c0_230, %c0_231] : memref<224x16xbf16, #tpu.memory_space<vmem>>, vector<224x16xbf16>
      %cst_232 = arith.constant dense<0.000000e+00> : vector<16x16xf32>
      %208 = tpu.matmul %206, %207, %cst_232 {dimension_numbers = #tpu.dot_dimension_numbers<[1], [0], [0], [1], [0, 0, 1, 1], [], []>} : vector<16x224xbf16>, vector<224x16xbf16>, vector<16x16xf32> -> vector<16x16xf32>
      %209 = vector.broadcast %18 : f32 to vector<16x16xf32>
      %210 = arith.addf %208, %209 : vector<16x16xf32>
      %211 = arith.negf %210 : vector<16x16xf32>
      %212 = math.exp %211 : vector<16x16xf32>
      %cst_233 = arith.constant 1.000000e+00 : f32
      %213 = vector.broadcast %cst_233 : f32 to vector<16x16xf32>
      %214 = arith.addf %213, %212 : vector<16x16xf32>
      %215 = arith.divf %213, %214 : vector<16x16xf32>
      %216 = vector.shape_cast %215 : vector<16x16xf32> to vector<1x16x16xf32>
      %c0_234 = arith.constant 0 : index
      %c0_235 = arith.constant 0 : index
      %c0_236 = arith.constant 0 : index
      %217 = vector.load %arg5[%c0_234, %c0_235, %c0_236] : memref<1x16x16xf32, #tpu.memory_space<vmem>>, vector<1x16x16xf32>
      tpu.vector_store %arg5[%c0_234, %c0_235, %c0_236], %216 {strides = array<i32>} : memref<1x16x16xf32, #tpu.memory_space<vmem>>, vector<1x16x16xf32>,
    } else {
    }
    return
  }
  func.func @transform_0(%arg0: i32, %arg1: i32) -> (i32, i32) {
    %c0_i32 = arith.constant 0 : i32
    %c0_i32_0 = arith.constant 0 : i32
    %c0_i32_1 = arith.constant 0 : i32
    return %c0_i32, %c0_i32_0 : i32, i32
  }
  func.func @transform_1(%arg0: i32, %arg1: i32) -> i32 {
    %c0_i32 = arith.constant 0 : i32
    %c0_i32_0 = arith.constant 0 : i32
    return %c0_i32 : i32
  }
  func.func @transform_2(%arg0: i32, %arg1: i32) -> (i32, i32, i32) {
    %c0_i32 = arith.constant 0 : i32
    %c0_i32_0 = arith.constant 0 : i32
    return %arg0, %arg1, %c0_i32 : i32, i32, i32
  }
  func.func @transform_3(%arg0: i32, %arg1: i32) -> (i32, i32, i32) {
    %c0_i32 = arith.constant 0 : i32
    %c0_i32_0 = arith.constant 0 : i32
    %c0_i32_1 = arith.constant 0 : i32
    return %arg0, %c0_i32, %c0_i32_0 : i32, i32, i32
  }
}

</mosaic_0001>

<llo_original>
// kernel: tpu_custom_call.1
$region0: #{tpu_custom_call.1}
  #allocation0 [shape = 'u32[]', space=smem, size = 0x4, offset = 0x4, fixed_abs, tag = 'smem constant byte address 0x4 - core index']
  #allocation1 [shape = 'u32[144,128]{1,0:T(1,128)}', space=vmem, size = 0x12000, scoped, tag = 'internal scratch']
  #allocation2 [shape = 'f32[1,256]{1,0:T(1,128)}', space=vmem, size = 0x400, scoped, tag = 'scratch operand']
  #allocation3 [shape = 'f32[1,256]{1,0:T(1,128)}', space=vmem, size = 0x400, scoped, tag = 'scratch operand']
  #allocation4 [shape = 'f32[2,24,16]{2,1,0:T(8,128)}', space=vmem, size = 0x6000, scoped, tag = 'scratch operand']
  #allocation5 [shape = 'f32[16,224]{1,0:T(8,128)}', space=vmem, size = 0x4000, scoped, tag = 'scratch operand']
  #allocation6 [shape = 'f32[1]{0:T(128)S(6)}', space=smem, size = 0x200, scoped, tag = 'scoped memory for tpu_custom_call.1']
  %s0 = inlined_call_operand.vmem [shape: bf16[224,16], index: 0, kind: input, shape index: {}]
  %s1 = inlined_call_operand.<no memory space> [shape: f32[1], index: 1, kind: input, shape index: {}]
  %s2 = inlined_call_operand.vmem [shape: f32[2,4,256], index: 2, kind: input, shape index: {}]
  %s3 = inlined_call_operand.hbm [shape: f32[2,16,16], index: 3, kind: output, shape index: {}]
  %s4 = sld [smem:[#allocation0]]
  $region53: #{tpu_custom_call.1} parent=0
    _
  %s6 = ssub.s32 1, %s4
  %s7 = scalar_select 0, %s6, %s4
  %8 = sst [smem:[#allocation6]] %s1
  $region1: #{tpu_custom_call.1} parent=0
    #allocation7 [shape = 'u8[16384]{0}', space=vmem, size = 0x4000, scoped, tag = 'output window, operand 0']
    #allocation8 [shape = 's32[2]{0}', space=sflag, size = 0x8, scoped, tag = 'scoped memory for tpu_custom_call.1']
    %9 = vsyncpa [#allocation8], 0
    %s10 = scalar_lea.sflag [#allocation8], 1
    %11 = vsyncpa %s10, 0
    loop: start=0, step=1, limit=4
    $region2: #{tpu_custom_call.1} parent=1 // loop_pre_header
      _
    $region3: #{tpu_custom_call.1} parent=1 // loop_header
      %s13 = sphi 0, %s17
      %p14 = scmp.ge.s32.totalorder %s13, 4
      %s20 = sphi 0, %s32
      %s21 = sphi 0, %s28
      %s22 = sphi 0, %s20
      %s23 = sphi 0, %s21
      %s24 = sphi 0, %s22
      %s25 = sphi 0, %s23
      %s33 = sphi 0, %s33
      %s35 = sphi 0, %s33
      %s36 = sphi 0, %s35
      %s50 = sphi 0, %s36
      %s54 = sphi 0, %s54
      %s56 = sphi 0, %s54
      %s57 = sphi 0, %s56
      %s71 = sphi 0, %s57
      %s79 = sphi 0, %s81
      %s82 = sphi 0, %s79
      %s83 = sphi 0, %s82
      %s99 = sphi 0, %s83
      %s105 = sphi 0, %s107
      %s108 = sphi 0, %s105
      %s109 = sphi 0, %s108
      %s125 = sphi 0, %s109
    $region4: #{tpu_custom_call.1} parent=1 // loop_header_branch
      %16 = sbr.rel (%p14) target = $region8
    $region5: #{tpu_custom_call.1} parent=1 // loop_body
      %s18 = ssub.s32 %s13, 1
      %s19 = ssub.s32 %s13, 2
      %s26 = sadd.s32 1, %s21
      %p27 = scmp.ge.s32.totalorder %s26, 1
      %s28 = scalar_select %p27, 0, %s26
      %s29 = sadd.s32 1, %s20
      %s30 = scalar_select %p27, %s29, %s20
      %p31 = scmp.ge.s32.totalorder %s30, 2
      %s32 = scalar_select %p31, 0, %s30
      %s34 = sadd.s32 %s33, 1
      %p37 = scmp.eq.s32.totalorder %s13, 1
      %p38 = scmp.ne.s32.totalorder %s33, %s35
      %p39 = scmp.eq.s32.totalorder %s13, 0
      %p40 = por %p38, %p39
      %p41 = scmp.ne.s32.totalorder %s33, %s35
      %p42 = scmp.eq.s32.totalorder %s18, 1
      %p43 = por %p41, %p42
      %p44 = scmp.ne.s32.totalorder %s35, %s36
      %p45 = scmp.eq.s32.totalorder %s18, 0
      %p46 = por %p44, %p45
      %p47 = scmp.ne.s32.totalorder %s35, %s36
      %p48 = scmp.eq.s32.totalorder %s19, 1
      %p49 = por %p47, %p48
      %p51 = scmp.ne.s32.totalorder %s36, %s50
      %p52 = scmp.eq.s32.totalorder %s19, 0
      %p53 = por %p51, %p52
      %s55 = sadd.s32 %s54, 1
      %p58 = scmp.eq.s32.totalorder %s13, 1
      %p59 = scmp.ne.s32.totalorder %s54, %s56
      %p60 = scmp.eq.s32.totalorder %s13, 0
      %p61 = por %p59, %p60
      %p62 = scmp.ne.s32.totalorder %s54, %s56
      %p63 = scmp.eq.s32.totalorder %s18, 1
      %p64 = por %p62, %p63
      %p65 = scmp.ne.s32.totalorder %s56, %s57
      %p66 = scmp.eq.s32.totalorder %s18, 0
      %p67 = por %p65, %p66
      %p68 = scmp.ne.s32.totalorder %s56, %s57
      %p69 = scmp.eq.s32.totalorder %s19, 1
      %p70 = por %p68, %p69
      %p72 = scmp.ne.s32.totalorder %s57, %s71
      %p73 = scmp.eq.s32.totalorder %s19, 0
      %p74 = por %p72, %p73
      %s75 = ssub.s32 %s20, %s32
      %s76 = ssub.s32 %s21, %s28
      %s77 = sor.u32 %s75, %s76
      %p78 = scmp.eq.s32.totalorder %s77, 0
      %s80 = sadd.s32 %s79, 1
      %s81 = scalar_select %p78, %s79, %s80
      %p84 = pneg %p78
      %p85 = scmp.eq.s32.totalorder %s13, 1
      %p86 = por %p84, %p85
      %p87 = scmp.ne.s32.totalorder %s79, %s82
      %p88 = scmp.eq.s32.totalorder %s13, 0
      %p89 = por %p87, %p88
      %p90 = scmp.ne.s32.totalorder %s79, %s82
      %p91 = scmp.eq.s32.totalorder %s18, 1
      %p92 = por %p90, %p91
      %p93 = scmp.ne.s32.totalorder %s82, %s83
      %p94 = scmp.eq.s32.totalorder %s18, 0
      %p95 = por %p93, %p94
      %p96 = scmp.ne.s32.totalorder %s82, %s83
      %p97 = scmp.eq.s32.totalorder %s19, 1
      %p98 = por %p96, %p97
      %p100 = scmp.ne.s32.totalorder %s83, %s99
      %p101 = scmp.eq.s32.totalorder %s19, 0
      %p102 = por %p100, %p101
      %s103 = ssub.s32 %s20, %s32
      %p104 = scmp.eq.s32.totalorder %s103, 0
      %s106 = sadd.s32 %s105, 1
      %s107 = scalar_select %p104, %s105, %s106
      %p110 = pneg %p104
      %p111 = scmp.eq.s32.totalorder %s13, 1
      %p112 = por %p110, %p111
      %p113 = scmp.ne.s32.totalorder %s105, %s108
      %p114 = scmp.eq.s32.totalorder %s13, 0
      %p115 = por %p113, %p114
      %p116 = scmp.ne.s32.totalorder %s105, %s108
      %p117 = scmp.eq.s32.totalorder %s18, 1
      %p118 = por %p116, %p117
      %p119 = scmp.ne.s32.totalorder %s108, %s109
      %p120 = scmp.eq.s32.totalorder %s18, 0
      %p121 = por %p119, %p120
      %p122 = scmp.ne.s32.totalorder %s108, %s109
      %p123 = scmp.eq.s32.totalorder %s19, 1
      %p124 = por %p122, %p123
      %p126 = scmp.ne.s32.totalorder %s109, %s125
      %p127 = scmp.eq.s32.totalorder %s19, 0
      %p128 = por %p126, %p127
      %p129 = scmp.le.s32.totalorder 1, %s13
      %p130 = scmp.lt.s32.totalorder %s13, 3
      %p131 = pnand %p129, %p130
      %p132 = pneg %p131
      // Predicated region
      $region9: #{tpu_custom_call.1} parent=5 // pred_check
        _
      $region10: #{tpu_custom_call.1} parent=5 // pred_check_branch
        %134 = sbr.rel (%p131) target = $region12
      $region11: #{tpu_custom_call.1} parent=5 // pred_region
        %s135 = ssub.s32 %s13, 1
        // Predicated region
        $region13: #{tpu_custom_call.1} parent=11 // pred_check
          %p136 = pneg %p46
        $region14: #{tpu_custom_call.1} parent=11 // pred_check_branch
          %138 = sbr.rel (%p136) target = $region16
        $region15: #{tpu_custom_call.1} parent=11 // pred_region
          _
        $region16: #{tpu_custom_call.1} parent=11 // pred_fallthru
          _
        // Predicated region
        $region17: #{tpu_custom_call.1} parent=11 // pred_check
          %p139 = pneg %p67
        $region18: #{tpu_custom_call.1} parent=11 // pred_check_branch
          %141 = sbr.rel (%p139) target = $region20
        $region19: #{tpu_custom_call.1} parent=11 // pred_region
          _
        $region20: #{tpu_custom_call.1} parent=11 // pred_fallthru
          _
      $region12: #{tpu_custom_call.1} parent=5 // pred_fallthru
        _
      %p142 = scmp.lt.s32.totalorder %s13, 2
      // Predicated region
      $region21: #{tpu_custom_call.1} parent=5 // pred_check
        %p143 = pneg %p142
      $region22: #{tpu_custom_call.1} parent=5 // pred_check_branch
        %145 = sbr.rel (%p143) target = $region24
      $region23: #{tpu_custom_call.1} parent=5 // pred_region
        // Predicated region
        $region25: #{tpu_custom_call.1} parent=23 // pred_check
          %p146 = pneg %p89
        $region26: #{tpu_custom_call.1} parent=23 // pred_check_branch
          %148 = sbr.rel (%p146) target = $region28
        $region27: #{tpu_custom_call.1} parent=23 // pred_region
          %p149 = scmp.lt.s32.totalorder %s20, 1
          %s150 = scalar_select %p149, %s20, 1
          %p151 = scmp.lt.s32.totalorder %s21, 0
          %s152 = scalar_select %p151, %s21, 0
          %s153 = smul.addr %s152, 2
          %s154 = smul.addr %s150, 2
          %s155 = sadd.s32 %s153, %s154
          %s156 = smul.addr %s155, 4
          %s157 = scalar_lea.vmem %s2, %s156
        $region28: #{tpu_custom_call.1} parent=23 // pred_fallthru
          _
      $region24: #{tpu_custom_call.1} parent=5 // pred_fallthru
        _
      %p158 = scmp.le.s32.totalorder 1, %s13
      %p159 = scmp.lt.s32.totalorder %s13, 3
      %p160 = pnand %p158, %p159
      %p161 = pneg %p160
      // Predicated region
      $region29: #{tpu_custom_call.1} parent=5 // pred_check
        _
      $region30: #{tpu_custom_call.1} parent=5 // pred_check_branch
        %163 = sbr.rel (%p160) target = $region32
      $region31: #{tpu_custom_call.1} parent=5 // pred_region
        %s164 = ssub.s32 %s13, 1
        %p165 = pneg %p46
        %p166 = pneg %p43
        %p167 = pneg %p67
        %p168 = pneg %p64
        %p169 = scmp.lt.s32.totalorder %s22, 1
        %s170 = scalar_select %p169, %s22, 1
        %p171 = scmp.lt.s32.totalorder %s23, 0
        %s172 = scalar_select %p171, %s23, 0
        %s173 = smul.addr %s172, 2
        %s174 = smul.addr %s170, 2
        %s175 = sadd.s32 %s173, %s174
        %s176 = smul.addr %s175, 4
        %s177 = scalar_lea.vmem %s2, %s176
        %p178 = pneg %p95
        %p179 = pneg %p92
        %p180 = pneg %p121
        %p181 = pneg %p118
        %s182 = sand.u32 %s108, 1
        %s183 = scalar_lea.sflag [#allocation8], %s182
        %s184 = sand.u32 %s108, 1
        %s185 = smul.addr %s184, 16
        %s186 = scalar_lea.vmem [#allocation7], %s185
        %p187 = scmp.lt.s32.totalorder %s22, 1
        %s188 = scalar_select %p187, %s22, 1
        %p189 = scmp.lt.s32.totalorder %s23, 0
        %s190 = scalar_select %p189, %s23, 0
        %s191 = smul.addr %s190, 2
        %s192 = smul.addr %s188, 2
        %s193 = sadd.s32 %s191, %s192
        %s194 = smul.addr %s193, 4
        %s195 = scalar_lea.vmem %s2, %s194
        %p197 = scmp.eq.s32.totalorder %s23, 0
        // Predicated region
        $region33: #{tpu_custom_call.1} parent=31 // pred_check
          %p198 = pneg %p197
        $region34: #{tpu_custom_call.1} parent=31 // pred_check_branch
          %200 = sbr.rel (%p198) target = $region36
        $region35: #{tpu_custom_call.1} parent=31 // pred_region
          %v201 = vlaneseq
          %vm202 = vcmp.ge.s32.totalorder %v201, 0
          %vm203 = vcmp.lt.s32.totalorder %v201, 256
          %vm204 = vmand %vm202, %vm203
          %205 = vst.msk [vmem:[#allocation2] sm:$0x3] %vm204, 0.0
          %206 = vst.msk [vmem:[#allocation3] sm:$0x3] %vm204, -inf
        $region36: #{tpu_custom_call.1} parent=31 // pred_fallthru
          _
        %v207 = vld [vmem:[%s195] sm:$0xff]
        %v208 = vld [vmem:[#allocation2] sm:$0x3]
        %v210 = vcombine.high %v207, %v207
        %vm212 = vcmask 1043456
        %v213 = vsel %vm212, %v207, 0.0
        %v214 = vrot.slane %v213, 4
        %v215 = vadd.f32 %v213, %v214
        %v216 = vrot.slane %v215, 2
        %v217 = vadd.f32 %v215, %v216
        %v218 = vrot.slane %v217, 1
        %v219 = vadd.f32 %v217, %v218
        %v220 = vsel %vm212, %v210, 0.0
        %v221 = vrot.slane %v220, 4
        %v222 = vadd.f32 %v220, %v221
        %v223 = vrot.slane %v222, 2
        %v224 = vadd.f32 %v222, %v223
        %v225 = vrot.slane %v224, 1
        %v226 = vadd.f32 %v224, %v225
        %v229 = vcombine.low %v219, %v226
        %v231 = vunpack.c.l.s4 1966171168
        %v232 = vunpack.c.0.s8 %v231
        %v233 = vlaneseq
        %v234 = vshrl.u32 %v233, 7
        %v235 = vsub.s32 %v232, %v234
        %v236 = vrot.slane %v229, %v235
        %v238 = vunpack.c.l.s4 1966171168
        %v239 = vunpack.c.0.s8 %v238
        %v240 = vlaneseq
        %v241 = vshrl.u32 %v240, 7
        %v242 = vsub.s32 %v239, %v241
        %v243 = vrot.slane %v236, %v242
        %v245 = vadd.f32 %v208, %v243
        %v246 = vlaneseq
        %vm247 = vcmp.ge.s32.totalorder %v246, 0
        %vm248 = vcmp.lt.s32.totalorder %v246, 256
        %vm249 = vmand %vm247, %vm248
        %250 = vst.msk [vmem:[#allocation2] sm:$0x3] %vm249, %v245
        %v251 = vld [vmem:[#allocation3] sm:$0x3]
        %v252 = vsel %vm212, %v207, -inf
        %v253 = vrot.slane %v252, 4
        %v254 = vmax.f32 %v252, %v253
        %v255 = vrot.slane %v254, 2
        %v256 = vmax.f32 %v254, %v255
        %v257 = vrot.slane %v256, 1
        %v258 = vmax.f32 %v256, %v257
        %v259 = vsel %vm212, %v210, -inf
        %v260 = vrot.slane %v259, 4
        %v261 = vmax.f32 %v259, %v260
        %v262 = vrot.slane %v261, 2
        %v263 = vmax.f32 %v261, %v262
        %v264 = vrot.slane %v263, 1
        %v265 = vmax.f32 %v263, %v264
        %v268 = vcombine.low %v258, %v265
        %v270 = vunpack.c.l.s4 1966171168
        %v271 = vunpack.c.0.s8 %v270
        %v272 = vlaneseq
        %v273 = vshrl.u32 %v272, 7
        %v274 = vsub.s32 %v271, %v273
        %v275 = vrot.slane %v268, %v274
        %v277 = vunpack.c.l.s4 1966171168
        %v278 = vunpack.c.0.s8 %v277
        %v279 = vlaneseq
        %v280 = vshrl.u32 %v279, 7
        %v281 = vsub.s32 %v278, %v280
        %v282 = vrot.slane %v275, %v281
        %v284 = vmax.f32 %v251, %v282
        %285 = vst.msk [vmem:[#allocation3] sm:$0x3] %vm249, %v284
        // Predicated region
        $region37: #{tpu_custom_call.1} parent=31 // pred_check
          %p286 = pneg %p197
        $region38: #{tpu_custom_call.1} parent=31 // pred_check_branch
          %288 = sbr.rel (%p286) target = $region40
        $region39: #{tpu_custom_call.1} parent=31 // pred_region
          %s289 = sld [smem:[#allocation6]]
          %vm290 = vcmask 124928
          %291 = vst.msk [vmem:[#allocation4] sm:$0x7] %vm290, 0.0
          %vm292 = vcmask 126976
          %293 = vst.msk [vmem:[#allocation4 + $0x13] sm:$0x1f] %vm292, 0.0
          %s294 = scalar_lea.vmem [#allocation4], 24
          %295 = vst.msk [vmem:[%s294] sm:$0x7] %vm290, 0.0
          %296 = vst.msk [vmem:[%s294 + $0x13] sm:$0x1f] %vm292, 0.0
          %v297 = vld [vmem:[#allocation2] sm:$0x1]
          %vm298 = vcmask 122880
          %299 = vst.msk [vmem:[#allocation4 + $0x3] sm:$0x1] %vm298, %v297
          %v300 = vld [vmem:[#allocation3] sm:$0x1]
          %301 = vst.msk [vmem:[%s294 + $0x3] sm:$0x1] %vm298, %v300
          %v302 = vld [vmem:[#allocation2] sm:$0x1]
          %v304 = vlaneseq
          %v305 = vshrl.u32 %v304, 7
          %v306 = vsub.s32 0, %v305
          %v307 = vrot.slane %v302, %v306
          %308 = vrot.lane.b32.xlu0 %v307, 112
          %v309 = vpop.permute.xlu0 %308
          %311 = vst.msk [vmem:[#allocation4 + $0x4] sm:$0x1] %vm298, %v309
          %v312 = vld [vmem:[#allocation3] sm:$0x1]
          %v314 = vlaneseq
          %v315 = vshrl.u32 %v314, 7
          %v316 = vsub.s32 0, %v315
          %v317 = vrot.slane %v312, %v316
          %318 = vrot.lane.b32.xlu0 %v317, 112
          %v319 = vpop.permute.xlu0 %318
          %321 = vst.msk [vmem:[%s294 + $0x4] sm:$0x1] %vm298, %v319
          %v322 = vld [vmem:[#allocation2] sm:$0x1]
          %v324 = vlaneseq
          %v325 = vshrl.u32 %v324, 7
          %v326 = vsub.s32 0, %v325
          %v327 = vrot.slane %v322, %v326
          %328 = vrot.lane.b32.xlu0 %v327, 96
          %v329 = vpop.permute.xlu0 %328
          %331 = vst.msk [vmem:[#allocation4 + $0x5] sm:$0x1] %vm298, %v329
          %v332 = vld [vmem:[#allocation3] sm:$0x1]
          %v334 = vlaneseq
          %v335 = vshrl.u32 %v334, 7
          %v336 = vsub.s32 0, %v335
          %v337 = vrot.slane %v332, %v336
          %338 = vrot.lane.b32.xlu0 %v337, 96
          %v339 = vpop.permute.xlu0 %338
          %341 = vst.msk [vmem:[%s294 + $0x5] sm:$0x1] %vm298, %v339
          %v342 = vld [vmem:[#allocation2] sm:$0x1]
          %v344 = vlaneseq
          %v345 = vshrl.u32 %v344, 7
          %v346 = vsub.s32 0, %v345
          %v347 = vrot.slane %v342, %v346
          %348 = vrot.lane.b32.xlu0 %v347, 80
          %v349 = vpop.permute.xlu0 %348
          %351 = vst.msk [vmem:[#allocation4 + $0x6] sm:$0x1] %vm298, %v349
          %v352 = vld [vmem:[#allocation3] sm:$0x1]
          %v354 = vlaneseq
          %v355 = vshrl.u32 %v354, 7
          %v356 = vsub.s32 0, %v355
          %v357 = vrot.slane %v352, %v356
          %358 = vrot.lane.b32.xlu0 %v357, 80
          %v359 = vpop.permute.xlu0 %358
          %361 = vst.msk [vmem:[%s294 + $0x6] sm:$0x1] %vm298, %v359
          %v362 = vld [vmem:[#allocation2] sm:$0x1]
          %v364 = vlaneseq
          %v365 = vshrl.u32 %v364, 7
          %v366 = vsub.s32 0, %v365
          %v367 = vrot.slane %v362, %v366
          %368 = vrot.lane.b32.xlu0 %v367, 64
          %v369 = vpop.permute.xlu0 %368
          %371 = vst.msk [vmem:[#allocation4 + $0x7] sm:$0x1] %vm298, %v369
          %v372 = vld [vmem:[#allocation3] sm:$0x1]
          %v374 = vlaneseq
          %v375 = vshrl.u32 %v374, 7
          %v376 = vsub.s32 0, %v375
          %v377 = vrot.slane %v372, %v376
          %378 = vrot.lane.b32.xlu0 %v377, 64
          %v379 = vpop.permute.xlu0 %378
          %381 = vst.msk [vmem:[%s294 + $0x7] sm:$0x1] %vm298, %v379
          %v382 = vld [vmem:[#allocation2] sm:$0x1]
          %v384 = vlaneseq
          %v385 = vshrl.u32 %v384, 7
          %v386 = vsub.s32 0, %v385
          %v387 = vrot.slane %v382, %v386
          %388 = vrot.lane.b32.xlu0 %v387, 48
          %v389 = vpop.permute.xlu0 %388
          %391 = vst.msk [vmem:[#allocation4 + $0x8] sm:$0x1] %vm298, %v389
          %v392 = vld [vmem:[#allocation3] sm:$0x1]
          %v394 = vlaneseq
          %v395 = vshrl.u32 %v394, 7
          %v396 = vsub.s32 0, %v395
          %v397 = vrot.slane %v392, %v396
          %398 = vrot.lane.b32.xlu0 %v397, 48
          %v399 = vpop.permute.xlu0 %398
          %401 = vst.msk [vmem:[%s294 + $0x8] sm:$0x1] %vm298, %v399
          %v402 = vld [vmem:[#allocation2] sm:$0x1]
          %v404 = vlaneseq
          %v405 = vshrl.u32 %v404, 7
          %v406 = vsub.s32 0, %v405
          %v407 = vrot.slane %v402, %v406
          %408 = vrot.lane.b32.xlu0 %v407, 32
          %v409 = vpop.permute.xlu0 %408
          %411 = vst.msk [vmem:[#allocation4 + $0x9] sm:$0x1] %vm298, %v409
          %v412 = vld [vmem:[#allocation3] sm:$0x1]
          %v414 = vlaneseq
          %v415 = vshrl.u32 %v414, 7
          %v416 = vsub.s32 0, %v415
          %v417 = vrot.slane %v412, %v416
          %418 = vrot.lane.b32.xlu0 %v417, 32
          %v419 = vpop.permute.xlu0 %418
          %421 = vst.msk [vmem:[%s294 + $0x9] sm:$0x1] %vm298, %v419
          %v422 = vld [vmem:[#allocation2] sm:$0x1]
          %v424 = vlaneseq
          %v425 = vshrl.u32 %v424, 7
          %v426 = vsub.s32 0, %v425
          %v427 = vrot.slane %v422, %v426
          %428 = vrot.lane.b32.xlu0 %v427, 16
          %v429 = vpop.permute.xlu0 %428
          %431 = vst.msk [vmem:[#allocation4 + $0xa] sm:$0x1] %vm298, %v429
          %v432 = vld [vmem:[#allocation3] sm:$0x1]
          %v434 = vlaneseq
          %v435 = vshrl.u32 %v434, 7
          %v436 = vsub.s32 0, %v435
          %v437 = vrot.slane %v432, %v436
          %438 = vrot.lane.b32.xlu0 %v437, 16
          %v439 = vpop.permute.xlu0 %438
          %441 = vst.msk [vmem:[%s294 + $0xa] sm:$0x1] %vm298, %v439
          %v442 = vld [vmem:[#allocation2 + $0x1] sm:$0x1]
          %443 = vst.msk [vmem:[#allocation4 + $0xb] sm:$0x1] %vm298, %v442
          %v444 = vld [vmem:[#allocation3 + $0x1] sm:$0x1]
          %445 = vst.msk [vmem:[%s294 + $0xb] sm:$0x1] %vm298, %v444
          %v446 = vld [vmem:[#allocation2 + $0x1] sm:$0x1]
          %v448 = vlaneseq
          %v449 = vshrl.u32 %v448, 7
          %v450 = vsub.s32 0, %v449
          %v451 = vrot.slane %v446, %v450
          %452 = vrot.lane.b32.xlu0 %v451, 112
          %v453 = vpop.permute.xlu0 %452
          %455 = vst.msk [vmem:[#allocation4 + $0xc] sm:$0x1] %vm298, %v453
          %v456 = vld [vmem:[#allocation3 + $0x1] sm:$0x1]
          %v458 = vlaneseq
          %v459 = vshrl.u32 %v458, 7
          %v460 = vsub.s32 0, %v459
          %v461 = vrot.slane %v456, %v460
          %462 = vrot.lane.b32.xlu0 %v461, 112
          %v463 = vpop.permute.xlu0 %462
          %465 = vst.msk [vmem:[%s294 + $0xc] sm:$0x1] %vm298, %v463
          %v466 = vld [vmem:[#allocation2 + $0x1] sm:$0x1]
          %v468 = vlaneseq
          %v469 = vshrl.u32 %v468, 7
          %v470 = vsub.s32 0, %v469
          %v471 = vrot.slane %v466, %v470
          %472 = vrot.lane.b32.xlu0 %v471, 96
          %v473 = vpop.permute.xlu0 %472
          %475 = vst.msk [vmem:[#allocation4 + $0xd] sm:$0x1] %vm298, %v473
          %v476 = vld [vmem:[#allocation3 + $0x1] sm:$0x1]
          %v478 = vlaneseq
          %v479 = vshrl.u32 %v478, 7
          %v480 = vsub.s32 0, %v479
          %v481 = vrot.slane %v476, %v480
          %482 = vrot.lane.b32.xlu0 %v481, 96
          %v483 = vpop.permute.xlu0 %482
          %485 = vst.msk [vmem:[%s294 + $0xd] sm:$0x1] %vm298, %v483
          %v486 = vld [vmem:[#allocation2 + $0x1] sm:$0x1]
          %v488 = vlaneseq
          %v489 = vshrl.u32 %v488, 7
          %v490 = vsub.s32 0, %v489
          %v491 = vrot.slane %v486, %v490
          %492 = vrot.lane.b32.xlu0 %v491, 80
          %v493 = vpop.permute.xlu0 %492
          %495 = vst.msk [vmem:[#allocation4 + $0xe] sm:$0x1] %vm298, %v493
          %v496 = vld [vmem:[#allocation3 + $0x1] sm:$0x1]
          %v498 = vlaneseq
          %v499 = vshrl.u32 %v498, 7
          %v500 = vsub.s32 0, %v499
          %v501 = vrot.slane %v496, %v500
          %502 = vrot.lane.b32.xlu0 %v501, 80
          %v503 = vpop.permute.xlu0 %502
          %505 = vst.msk [vmem:[%s294 + $0xe] sm:$0x1] %vm298, %v503
          %v506 = vld [vmem:[#allocation2 + $0x1] sm:$0x1]
          %v508 = vlaneseq
          %v509 = vshrl.u32 %v508, 7
          %v510 = vsub.s32 0, %v509
          %v511 = vrot.slane %v506, %v510
          %512 = vrot.lane.b32.xlu0 %v511, 64
          %v513 = vpop.permute.xlu0 %512
          %515 = vst.msk [vmem:[#allocation4 + $0xf] sm:$0x1] %vm298, %v513
          %v516 = vld [vmem:[#allocation3 + $0x1] sm:$0x1]
          %v518 = vlaneseq
          %v519 = vshrl.u32 %v518, 7
          %v520 = vsub.s32 0, %v519
          %v521 = vrot.slane %v516, %v520
          %522 = vrot.lane.b32.xlu0 %v521, 64
          %v523 = vpop.permute.xlu0 %522
          %525 = vst.msk [vmem:[%s294 + $0xf] sm:$0x1] %vm298, %v523
          %v526 = vld [vmem:[#allocation2 + $0x1] sm:$0x1]
          %v528 = vlaneseq
          %v529 = vshrl.u32 %v528, 7
          %v530 = vsub.s32 0, %v529
          %v531 = vrot.slane %v526, %v530
          %532 = vrot.lane.b32.xlu0 %v531, 48
          %v533 = vpop.permute.xlu0 %532
          %535 = vst.msk [vmem:[#allocation4 + $0x10] sm:$0x1] %vm298, %v533
          %v536 = vld [vmem:[#allocation3 + $0x1] sm:$0x1]
          %v538 = vlaneseq
          %v539 = vshrl.u32 %v538, 7
          %v540 = vsub.s32 0, %v539
          %v541 = vrot.slane %v536, %v540
          %542 = vrot.lane.b32.xlu0 %v541, 48
          %v543 = vpop.permute.xlu0 %542
          %545 = vst.msk [vmem:[%s294 + $0x10] sm:$0x1] %vm298, %v543
          %v546 = vld [vmem:[#allocation2 + $0x1] sm:$0x1]
          %v548 = vlaneseq
          %v549 = vshrl.u32 %v548, 7
          %v550 = vsub.s32 0, %v549
          %v551 = vrot.slane %v546, %v550
          %552 = vrot.lane.b32.xlu0 %v551, 32
          %v553 = vpop.permute.xlu0 %552
          %555 = vst.msk [vmem:[#allocation4 + $0x11] sm:$0x1] %vm298, %v553
          %v556 = vld [vmem:[#allocation3 + $0x1] sm:$0x1]
          %v558 = vlaneseq
          %v559 = vshrl.u32 %v558, 7
          %v560 = vsub.s32 0, %v559
          %v561 = vrot.slane %v556, %v560
          %562 = vrot.lane.b32.xlu0 %v561, 32
          %v563 = vpop.permute.xlu0 %562
          %565 = vst.msk [vmem:[%s294 + $0x11] sm:$0x1] %vm298, %v563
          %v566 = vld [vmem:[#allocation2 + $0x1] sm:$0x1]
          %v568 = vlaneseq
          %v569 = vshrl.u32 %v568, 7
          %v570 = vsub.s32 0, %v569
          %v571 = vrot.slane %v566, %v570
          %572 = vrot.lane.b32.xlu0 %v571, 16
          %v573 = vpop.permute.xlu0 %572
          %575 = vst.msk [vmem:[#allocation4 + $0x12] sm:$0x1] %vm298, %v573
          %v576 = vld [vmem:[#allocation3 + $0x1] sm:$0x1]
          %v578 = vlaneseq
          %v579 = vshrl.u32 %v578, 7
          %v580 = vsub.s32 0, %v579
          %v581 = vrot.slane %v576, %v580
          %582 = vrot.lane.b32.xlu0 %v581, 16
          %v583 = vpop.permute.xlu0 %582
          %585 = vst.msk [vmem:[%s294 + $0x12] sm:$0x1] %vm298, %v583
          %v586 = vld [vmem:[#allocation4] sm:$0xff]
          %v587 = vld [vmem:[#allocation4 + $0x8] sm:$0xff]
          %vm588 = vcmask 130048
          %589 = vst.msk [vmem:[#allocation5] sm:$0xff] %vm588, %v586
          %590 = vst.msk [vmem:[#allocation5 + $0x10] sm:$0xff] %vm588, %v587
          %v591 = vld [vmem:[#allocation4 + $0x1] sm:$0xff]
          %v592 = vld [vmem:[#allocation4 + $0x9] sm:$0xff]
          %595 = vrot.lane.b32.xlu0 %v591, 16
          %v596 = vpop.permute.xlu0 %595
          %597 = vrot.lane.b32.xlu0 %v592, 16
          %v598 = vpop.permute.xlu0 %597
          %vm601 = vcmask 261248
          %602 = vst.msk [vmem:[#allocation5] sm:$0xff] %vm601, %v596
          %603 = vst.msk [vmem:[#allocation5 + $0x10] sm:$0xff] %vm601, %v598
          %v604 = vld [vmem:[#allocation4 + $0x2] sm:$0xff]
          %v605 = vld [vmem:[#allocation4 + $0xa] sm:$0xff]
          %608 = vrot.lane.b32.xlu0 %v604, 32
          %v609 = vpop.permute.xlu0 %608
          %610 = vrot.lane.b32.xlu0 %v605, 32
          %v611 = vpop.permute.xlu0 %610
          %vm614 = vcmask 392448
          %615 = vst.msk [vmem:[#allocation5] sm:$0xff] %vm614, %v609
          %616 = vst.msk [vmem:[#allocation5 + $0x10] sm:$0xff] %vm614, %v611
          %v617 = vld [vmem:[#allocation4 + $0x3] sm:$0xff]
          %v618 = vld [vmem:[#allocation4 + $0xb] sm:$0xff]
          %621 = vrot.lane.b32.xlu0 %v617, 48
          %v622 = vpop.permute.xlu0 %621
          %623 = vrot.lane.b32.xlu0 %v618, 48
          %v624 = vpop.permute.xlu0 %623
          %vm627 = vcmask 523648
          %628 = vst.msk [vmem:[#allocation5] sm:$0xff] %vm627, %v622
          %629 = vst.msk [vmem:[#allocation5 + $0x10] sm:$0xff] %vm627, %v624
          %v630 = vld [vmem:[#allocation4 + $0x4] sm:$0xff]
          %v631 = vld [vmem:[#allocation4 + $0xc] sm:$0xff]
          %634 = vrot.lane.b32.xlu0 %v630, 64
          %v635 = vpop.permute.xlu0 %634
          %636 = vrot.lane.b32.xlu0 %v631, 64
          %v637 = vpop.permute.xlu0 %636
          %vm640 = vcmask 654848
          %641 = vst.msk [vmem:[#allocation5] sm:$0xff] %vm640, %v635
          %642 = vst.msk [vmem:[#allocation5 + $0x10] sm:$0xff] %vm640, %v637
          %v643 = vld [vmem:[#allocation4 + $0x5] sm:$0xff]
          %v644 = vld [vmem:[#allocation4 + $0xd] sm:$0xff]
          %647 = vrot.lane.b32.xlu0 %v643, 80
          %v648 = vpop.permute.xlu0 %647
          %649 = vrot.lane.b32.xlu0 %v644, 80
          %v650 = vpop.permute.xlu0 %649
          %vm653 = vcmask 786048
          %654 = vst.msk [vmem:[#allocation5] sm:$0xff] %vm653, %v648
          %655 = vst.msk [vmem:[#allocation5 + $0x10] sm:$0xff] %vm653, %v650
          %v656 = vld [vmem:[#allocation4 + $0x6] sm:$0xff]
          %v657 = vld [vmem:[#allocation4 + $0xe] sm:$0xff]
          %660 = vrot.lane.b32.xlu0 %v656, 96
          %v661 = vpop.permute.xlu0 %660
          %662 = vrot.lane.b32.xlu0 %v657, 96
          %v663 = vpop.permute.xlu0 %662
          %vm666 = vcmask 917248
          %667 = vst.msk [vmem:[#allocation5] sm:$0xff] %vm666, %v661
          %668 = vst.msk [vmem:[#allocation5 + $0x10] sm:$0xff] %vm666, %v663
          %v669 = vld [vmem:[%s294] sm:$0xff]
          %v670 = vld [vmem:[%s294 + $0x8] sm:$0xff]
          %673 = vrot.lane.b32.xlu0 %v669, 112
          %v674 = vpop.permute.xlu0 %673
          %675 = vrot.lane.b32.xlu0 %v670, 112
          %v676 = vpop.permute.xlu0 %675
          %vm679 = vcmask 1048448
          %680 = vst.msk [vmem:[#allocation5] sm:$0xff] %vm679, %v674
          %681 = vst.msk [vmem:[#allocation5 + $0x10] sm:$0xff] %vm679, %v676
          %v682 = vld [vmem:[%s294 + $0x1] sm:$0xff]
          %v683 = vld [vmem:[%s294 + $0x9] sm:$0xff]
          %684 = vst.msk [vmem:[#allocation5 + $0x8] sm:$0xff] %vm588, %v682
          %685 = vst.msk [vmem:[#allocation5 + $0x18] sm:$0xff] %vm588, %v683
          %v686 = vld [vmem:[%s294 + $0x2] sm:$0xff]
          %v687 = vld [vmem:[%s294 + $0xa] sm:$0xff]
          %690 = vrot.lane.b32.xlu0 %v686, 16
          %v691 = vpop.permute.xlu0 %690
          %692 = vrot.lane.b32.xlu0 %v687, 16
          %v693 = vpop.permute.xlu0 %692
          %696 = vst.msk [vmem:[#allocation5 + $0x8] sm:$0xff] %vm601, %v691
          %697 = vst.msk [vmem:[#allocation5 + $0x18] sm:$0xff] %vm601, %v693
          %v698 = vld [vmem:[%s294 + $0x3] sm:$0xff]
          %v699 = vld [vmem:[%s294 + $0xb] sm:$0xff]
          %702 = vrot.lane.b32.xlu0 %v698, 32
          %v703 = vpop.permute.xlu0 %702
          %704 = vrot.lane.b32.xlu0 %v699, 32
          %v705 = vpop.permute.xlu0 %704
          %708 = vst.msk [vmem:[#allocation5 + $0x8] sm:$0xff] %vm614, %v703
          %709 = vst.msk [vmem:[#allocation5 + $0x18] sm:$0xff] %vm614, %v705
          %v710 = vld [vmem:[%s294 + $0x4] sm:$0xff]
          %v711 = vld [vmem:[%s294 + $0xc] sm:$0xff]
          %714 = vrot.lane.b32.xlu0 %v710, 48
          %v715 = vpop.permute.xlu0 %714
          %716 = vrot.lane.b32.xlu0 %v711, 48
          %v717 = vpop.permute.xlu0 %716
          %720 = vst.msk [vmem:[#allocation5 + $0x8] sm:$0xff] %vm627, %v715
          %721 = vst.msk [vmem:[#allocation5 + $0x18] sm:$0xff] %vm627, %v717
          %v722 = vld [vmem:[%s294 + $0x5] sm:$0xff]
          %v723 = vld [vmem:[%s294 + $0xd] sm:$0xff]
          %726 = vrot.lane.b32.xlu0 %v722, 64
          %v727 = vpop.permute.xlu0 %726
          %728 = vrot.lane.b32.xlu0 %v723, 64
          %v729 = vpop.permute.xlu0 %728
          %732 = vst.msk [vmem:[#allocation5 + $0x8] sm:$0xff] %vm640, %v727
          %733 = vst.msk [vmem:[#allocation5 + $0x18] sm:$0xff] %vm640, %v729
          %v734 = vld [vmem:[%s294 + $0x6] sm:$0xff]
          %v735 = vld [vmem:[%s294 + $0xe] sm:$0xff]
          %738 = vrot.lane.b32.xlu0 %v734, 80
          %v739 = vpop.permute.xlu0 %738
          %740 = vrot.lane.b32.xlu0 %v735, 80
          %v741 = vpop.permute.xlu0 %740
          %744 = vst.msk [vmem:[#allocation5 + $0x8] sm:$0xff] %vm653, %v739
          %745 = vst.msk [vmem:[#allocation5 + $0x18] sm:$0xff] %vm653, %v741
          %v746 = vld [vmem:[#allocation5] sm:$0xff]
          %v747 = vld [vmem:[#allocation5 + $0x8] sm:$0xff]
          %v748 = vld [vmem:[#allocation5 + $0x10] sm:$0xff]
          %v749 = vld [vmem:[#allocation5 + $0x18] sm:$0xff]
          %v750 = vpack.c.bf16 %v748, %v746
          %v751 = vpack.c.bf16 %v749, %v747
          %v752 = vld [vmem:[%s0] sm:$0xf]
          %v753 = vld [vmem:[%s0 + $0x4] sm:$0xf]
          %v754 = vld [vmem:[%s0 + $0x8] sm:$0xf]
          %v755 = vld [vmem:[%s0 + $0xc] sm:$0xf]
          %v756 = vld [vmem:[%s0 + $0x10] sm:$0xf]
          %v757 = vld [vmem:[%s0 + $0x14] sm:$0xf]
          %v758 = vld [vmem:[%s0 + $0x18] sm:$0xf]
          %v759 = vld [vmem:[%s0 + $0x1c] sm:$0xf]
          %v760 = vld [vmem:[%s0 + $0x20] sm:$0xf]
          %v761 = vld [vmem:[%s0 + $0x24] sm:$0xf]
          %v762 = vld [vmem:[%s0 + $0x28] sm:$0xf]
          %v763 = vld [vmem:[%s0 + $0x2c] sm:$0xf]
          %v764 = vld [vmem:[%s0 + $0x30] sm:$0xf]
          %v765 = vld [vmem:[%s0 + $0x34] sm:$0xf]
          %v766 = vld [vmem:[%s0 + $0x38] sm:$0xf]
          %v767 = vld [vmem:[%s0 + $0x3c] sm:$0xf]
          %v768 = vld [vmem:[%s0 + $0x40] sm:$0xf]
          %v769 = vld [vmem:[%s0 + $0x44] sm:$0xf]
          %v770 = vld [vmem:[%s0 + $0x48] sm:$0xf]
          %v771 = vld [vmem:[%s0 + $0x4c] sm:$0xf]
          %v772 = vld [vmem:[%s0 + $0x50] sm:$0xf]
          %v773 = vld [vmem:[%s0 + $0x54] sm:$0xf]
          %v774 = vld [vmem:[%s0 + $0x58] sm:$0xf]
          %v775 = vld [vmem:[%s0 + $0x5c] sm:$0xf]
          %v776 = vld [vmem:[%s0 + $0x60] sm:$0xf]
          %v777 = vld [vmem:[%s0 + $0x64] sm:$0xf]
          %v778 = vld [vmem:[%s0 + $0x68] sm:$0xf]
          %v779 = vld [vmem:[%s0 + $0x6c] sm:$0xf]
          %v780 = vstv %s289
          %v809 = vunpack.c.l.b16 %v752
          %v810 = vunpack.c.l.b16 %v753
          %v811 = vunpack.c.l.b16 %v754
          %v812 = vunpack.c.l.b16 %v755
          %v813 = vunpack.c.l.b16 %v756
          %v814 = vunpack.c.l.b16 %v757
          %v815 = vunpack.c.l.b16 %v758
          %v816 = vunpack.c.l.b16 %v759
          %v817 = vunpack.c.l.b16 %v760
          %v818 = vunpack.c.l.b16 %v761
          %v819 = vunpack.c.l.b16 %v762
          %v820 = vunpack.c.l.b16 %v763
          %v821 = vunpack.c.l.b16 %v764
          %v822 = vunpack.c.l.b16 %v765
          %v823 = vunpack.c.l.b16 %v766
          %v824 = vunpack.c.l.b16 %v767
          %v825 = vunpack.c.l.b16 %v768
          %v826 = vunpack.c.l.b16 %v769
          %v827 = vunpack.c.l.b16 %v770
          %v828 = vunpack.c.l.b16 %v771
          %v829 = vunpack.c.l.b16 %v772
          %v830 = vunpack.c.l.b16 %v773
          %v831 = vunpack.c.l.b16 %v774
          %v832 = vunpack.c.l.b16 %v775
          %v833 = vunpack.c.l.b16 %v776
          %v834 = vunpack.c.l.b16 %v777
          %v835 = vunpack.c.l.b16 %v778
          %v836 = vunpack.c.l.b16 %v779
          %v837 = vpack.c.b16 %v810, %v809
          %v838 = vpack.c.b16 %v812, %v811
          %v839 = vpack.c.b16 %v814, %v813
          %v840 = vpack.c.b16 %v816, %v815
          %v841 = vpack.c.b16 %v818, %v817
          %v842 = vpack.c.b16 %v820, %v819
          %v843 = vpack.c.b16 %v822, %v821
          %v844 = vpack.c.b16 %v824, %v823
          %v845 = vpack.c.b16 %v826, %v825
          %v846 = vpack.c.b16 %v828, %v827
          %v847 = vpack.c.b16 %v830, %v829
          %v848 = vpack.c.b16 %v832, %v831
          %v849 = vpack.c.b16 %v834, %v833
          %v850 = vpack.c.b16 %v836, %v835
          %vm865 = vcmask 785408
          %v867 = vsel %vm865, %v751, 0
          %869 = vmatprep.subr.bf16.mxu0 0
          %870 = vmatpush1.bf16.msra.mxu0 %v837
          %871 = vmatprep.subr.bf16.mxu0 0
          %872 = vmatpush1.bf16.msra.mxu0 %v838
          %873 = vmatprep.subr.bf16.mxu0 0
          %874 = vmatpush1.bf16.msra.mxu0 %v839
          %875 = vmatprep.subr.bf16.mxu0 0
          %876 = vmatpush1.bf16.msra.mxu0 %v840
          %877 = vmatprep.subr.bf16.mxu0 0
          %878 = vmatpush1.bf16.msra.mxu0 %v841
          %879 = vmatprep.subr.bf16.mxu0 0
          %880 = vmatpush1.bf16.msra.mxu0 %v842
          %881 = vmatprep.subr.bf16.mxu0 0
          %882 = vmatpush1.bf16.msra.mxu0 %v843
          %883 = vmatprep.subr.bf16.mxu0 0
          %884 = vmatpush1.bf16.msra.mxu0 %v844
          %885 = vmatprep.subr.bf16.mxu0 0
          %886 = vmatpush1.bf16.msra.mxu0 %v845
          %887 = vmatprep.subr.bf16.mxu0 0
          %888 = vmatpush1.bf16.msra.mxu0 %v846
          %889 = vmatprep.subr.bf16.mxu0 0
          %890 = vmatpush1.bf16.msra.mxu0 %v847
          %891 = vmatprep.subr.bf16.mxu0 0
          %892 = vmatpush1.bf16.msra.mxu0 %v848
          %893 = vmatprep.subr.bf16.mxu0 0
          %894 = vmatpush1.bf16.msra.mxu0 %v849
          %895 = vmatprep.subr.bf16.mxu0 0
          %896 = vmatpush1.bf16.msra.mxu0 %v850
          %897 = vmatprep.subr.bf16.mxu0 0
          %898 = vmatpush1.bf16.msra.mxu0 0
          %899 = vmatprep.subr.bf16.mxu0 0
          %900 = vmatpush1.bf16.msra.mxu0 0
          %901 = vmatprep.mubr.bf16.mxu0 %v867
          %902 = vmatmul.mubr.bf16.gmra.mrb[0].mxu0 %v750
          %v903 = vpop.f32.mrb[0].mxu0
          %v904 = vadd.f32 %v780, %v903
          %v905 = vpop.f32.mrb[0].mxu0
          %v906 = vpop.f32.mrb[0].mxu0
          %v907 = vadd.f32 %v780, %v906
          %v908 = vpop.f32.mrb[0].mxu0
          %909 = vdwg.mxu0
          %v910 = vxor.u32 %v904, 2147483648
          %v911 = vxor.u32 %v907, 2147483648
          %v912 = vmul.f32 %v910, 1.442695
          %v913 = vpow.pop %v912
          %v914 = vmul.f32 %v911, 1.442695
          %v915 = vpow.pop %v914
          %v916 = vadd.f32 %v913, 1.0
          %v917 = vadd.f32 %v915, 1.0
          %v918 = vrcp.pop %v916
          %v919 = vmul.f32 1.0, %v918
          %v920 = vrcp.pop %v917
          %v921 = vmul.f32 1.0, %v920
          %922 = vst.msk [vmem:[%s186] sm:$0xff] %vm588, %v919
          %923 = vst.msk [vmem:[%s186 + $0x8] sm:$0xff] %vm588, %v921
        $region40: #{tpu_custom_call.1} parent=31 // pred_fallthru
          _
        %s924 = sand.u32 %s108, 1
        %s925 = scalar_lea.sflag [#allocation8], %s924
        %s926 = sand.u32 %s108, 1
        %s927 = smul.addr %s926, 16
        %s928 = scalar_lea.vmem [#allocation7], %s927
        // Predicated region
        $region41: #{tpu_custom_call.1} parent=31 // pred_check
          %p929 = pneg %p118
        $region42: #{tpu_custom_call.1} parent=31 // pred_check_branch
          %931 = sbr.rel (%p929) target = $region44
        $region43: #{tpu_custom_call.1} parent=31 // pred_region
          %s933 = ssub.s32 256, 256
          %934 = vsyncadd %s925, %s933
          %s935 = smul.addr %s22, 2
          %s936 = smul.addr %s935, 128
          %s937 = scalar_lea.hbm %s3, %s936
          %s938 = sshll.u32 %s928, 4
          %s939 = int_to_ptr.vmem [resolvable:$true] %s938
          %944 = dma.vmem_to_hbm [thread:$0]  %s939, 256, %s937, %s925, 128, 128, 8
        $region44: #{tpu_custom_call.1} parent=31 // pred_fallthru
          _
      $region32: #{tpu_custom_call.1} parent=5 // pred_fallthru
        _
      %p945 = scmp.le.s32.totalorder 2, %s13
      // Predicated region
      $region45: #{tpu_custom_call.1} parent=5 // pred_check
        %p946 = pneg %p945
      $region46: #{tpu_custom_call.1} parent=5 // pred_check_branch
        %948 = sbr.rel (%p946) target = $region48
      $region47: #{tpu_custom_call.1} parent=5 // pred_region
        %s949 = ssub.s32 %s13, 2
        // Predicated region
        $region49: #{tpu_custom_call.1} parent=47 // pred_check
          %p950 = pneg %p124
        $region50: #{tpu_custom_call.1} parent=47 // pred_check_branch
          %952 = sbr.rel (%p950) target = $region52
        $region51: #{tpu_custom_call.1} parent=47 // pred_region
          %s953 = sand.u32 %s109, 1
          %s954 = scalar_lea.sflag [#allocation8], %s953
          %s955 = sand.u32 %s109, 1
          %s956 = smul.addr %s955, 16
          %s957 = scalar_lea.vmem [#allocation7], %s956
          %958 = dma.done %s954, 256
        $region52: #{tpu_custom_call.1} parent=47 // pred_fallthru
          _
      $region48: #{tpu_custom_call.1} parent=5 // pred_fallthru
        _
    $region6: #{tpu_custom_call.1} parent=1 // loop_footer
      %s17 = sadd.s32 1, %s13
    $region7: #{tpu_custom_call.1} parent=1 // loop_footer_branch
      %12 = sbr.rel target = $region3
    $region8: #{tpu_custom_call.1} parent=1 // loop_exit
      _
    %959 = vsyncpa [#allocation8], 1
    %s960 = scalar_lea.sflag [#allocation8], 1
    %961 = vsyncpa %s960, 1

</llo_original>
